<compile_context>
chip_gen: v6e
topology: v6e:2x2x1
jax: 0.10.0
libtpu: 0.0.40
codegen_flags: <defaults>
</compile_context>

<pallas_src>
import jax
import jax.numpy as jnp
from jax.experimental import pallas as pl
from jax.experimental.pallas import tpu as pltpu


# ---------------------------------------------------------------------------
# Pallas kernels
# ---------------------------------------------------------------------------
def _conv_pool_kernel(p_ref, w_ref, b_ref, o_ref):
    """Fused conv-as-matmul + bias + ReLU + 2x2 max-pool (stride 2).

    p_ref: [4, TM, Kp]  im2col patches, axis 0 = pool phase (dy, dx), bf16
    w_ref: [Kp, Coutp]  conv weight, rows in (i, j, c) order, zero-padded, bf16
    b_ref: [1, Coutp]   bias (zero-padded), f32
    o_ref: [TM, Coutp]  pooled + ReLU'd activation, bf16

    All 4 phases are fed to the MXU as a single [4*TM, Kp] @ [Kp, Coutp] matmul
    (one weight push / one result drain per grid step); the pool is a VPU max
    over the four sublane-aligned row slices.  Since the bias is constant per
    channel and ReLU is monotone:
        max_dd(relu(dot_dd + b)) == relu(max_dd(dot_dd) + b).
    """
    tm, kp = p_ref.shape[1], p_ref.shape[2]
    p = p_ref[...].reshape(4 * tm, kp)          # layout-free: TM % 16 == 0
    y = jnp.dot(p, w_ref[...], preferred_element_type=jnp.float32)
    y = jnp.maximum(jnp.maximum(y[0 * tm:1 * tm], y[1 * tm:2 * tm]),
                    jnp.maximum(y[2 * tm:3 * tm], y[3 * tm:4 * tm]))
    o_ref[...] = jnp.maximum(y + b_ref[...], 0.0).astype(o_ref.dtype)


def _mlp3_kernel(x_ref, w1_ref, b1_ref, w2_ref, b2_ref, w3_ref, b3_ref, o_ref):
    """Fused fc1 -> fc2 -> fc3 (each + bias + ReLU); intermediates stay in VMEM.

    Hidden widths are pre-padded to 128 so every chained dot is lane-dense.
    NOTE: the final ReLU on the fc3 logits mirrors the reference forward();
    flag it if these outputs are meant to feed a softmax / loss.
    """
    h = jnp.dot(x_ref[...], w1_ref[...], preferred_element_type=jnp.float32)
    h = jnp.maximum(h + b1_ref[...], 0.0).astype(w2_ref.dtype)
    h = jnp.dot(h, w2_ref[...], preferred_element_type=jnp.float32)
    h = jnp.maximum(h + b2_ref[...], 0.0).astype(w3_ref.dtype)
    h = jnp.dot(h, w3_ref[...], preferred_element_type=jnp.float32)
    o_ref[...] = jnp.maximum(h + b3_ref[...], 0.0).astype(o_ref.dtype)


# ---------------------------------------------------------------------------
# Small helpers
# ---------------------------------------------------------------------------
def _round_up(n, m):
    return -(-n // m) * m


def _row_tile(m, cap=4096):
    """Row (M) tile: full extent when tiny, otherwise split into >=2 blocks
    (so both v7x TensorCores engage on the 'parallel' grid axis), capped at
    `cap` rows so double-buffered conv2 blocks stay ~10-15 MB, well inside
    v7x's 32 MiB scoped-VMEM default (v5e/v6e have far more headroom).
    Tiles are multiples of 16 so bf16 sublane tiles stay aligned for the
    in-kernel [4, TM, K] -> [4*TM, K] collapse."""
    if m <= 256:
        return m
    half = -(-m // 2)
    return min(cap, _round_up(half, 16))


def _im2col_pooled_nhwc(x, kh, kw, k_pad, cin=None):
    """x: [B, H, W, C] -> ([4, B*ohp*owp, k_pad], ohp, owp).

    Phase dd = 2*dy + dx corresponds to conv-output pixel (2*ph+dy, 2*pw+dx).
    Columns are in (i, j, c) order (matching the prepped weight rows), and the
    zero-pad up to k_pad is folded into the same concatenate, so the patch
    matrix hits HBM exactly once (no transpose, no extra pad copy).
    """
    # TODO(synk): move this gather in-kernel (full conv->conv->MLP fusion over batch-row tiles) to kill the remaining ~12x patch HBM blowup; kept host-side here to avoid strided-gather lowering risk.
    B, H, W, C = x.shape
    c = C if cin is None else cin
    oh, ow = H - kh + 1, W - kw + 1
    ohp, owp = oh // 2, ow // 2
    k = kh * kw * c
    assert k_pad >= k
    phases = []
    for dy in range(2):
        for dx in range(2):
            taps = [x[:, dy + i:dy + i + 2 * ohp - 1:2,
                      dx + j:dx + j + 2 * owp - 1:2, :c]
                    for i in range(kh) for j in range(kw)]
            if k_pad > k:
                taps.append(jnp.zeros((B, ohp, owp, k_pad - k), x.dtype))
            p = jnp.concatenate(taps, axis=-1)          # [B, ohp, owp, k_pad]
            phases.append(p.reshape(B * ohp * owp, k_pad))
    return jnp.stack(phases, axis=0), ohp, owp


# ---------------------------------------------------------------------------
# Layer wrappers (pallas_call plumbing)
# ---------------------------------------------------------------------------
def conv_relu_pool(x_nhwc, w2, b2, kh=5, kw=5, cin=None):
    """relu(conv2d(x) + b) followed by 2x2 max-pool, fused in one Pallas kernel.

    x_nhwc: [B, H, W, C] bf16; w2: [Kp, Coutp] prepped weight; b2: [1, Coutp].
    `cin` limits how many input channels are real (trailing zero-pad channels
    of the previous layer are skipped so K does not grow).
    Returns [B, ohp, owp, Coutp] NHWC bf16 (padded output channels are zero).
    """
    B = x_nhwc.shape[0]
    kp, coutp = w2.shape
    patches, ohp, owp = _im2col_pooled_nhwc(x_nhwc, kh, kw, kp, cin=cin)
    m = patches.shape[1]
    tm = _row_tile(m)
    cost = pl.CostEstimate(
        flops=2 * 4 * m * kp * coutp,
        transcendentals=0,
        bytes_accessed=4 * m * kp * 2 + kp * coutp * 2 + coutp * 4 + m * coutp * 2,
    )
    y = pl.pallas_call(
        _conv_pool_kernel,
        out_shape=jax.ShapeDtypeStruct((m, coutp), jnp.bfloat16),
        grid=(pl.cdiv(m, tm),),
        in_specs=[
            pl.BlockSpec((4, tm, kp), lambda i: (0, i, 0)),
            pl.BlockSpec((kp, coutp), lambda i: (0, 0)),
            pl.BlockSpec((1, coutp), lambda i: (0, 0)),
        ],
        out_specs=pl.BlockSpec((tm, coutp), lambda i: (i, 0)),
        compiler_params=pltpu.CompilerParams(dimension_semantics=("parallel",)),
        cost_estimate=cost,
    )(patches, w2, b2)
    return y.reshape(B, ohp, owp, coutp)


def mlp3_relu(x, w1, b1, w2, b2, w3, b3):
    """Fused relu(fc3(relu(fc2(relu(fc1(x)))))) in a single Pallas kernel."""
    B, K = x.shape
    nout = w3.shape[1]
    tb = _row_tile(B)
    weight_specs = [pl.BlockSpec(t.shape, lambda i: (0, 0))
                    for t in (w1, b1, w2, b2, w3, b3)]
    cost = pl.CostEstimate(
        flops=2 * B * (K * w1.shape[1] + w2.shape[0] * w2.shape[1]
                       + w3.shape[0] * nout),
        transcendentals=0,
        bytes_accessed=(B * K * 2 + B * nout * 4
                        + sum(2 * t.size for t in (w1, w2, w3))
                        + sum(4 * t.size for t in (b1, b2, b3))),
    )
    return pl.pallas_call(
        _mlp3_kernel,
        out_shape=jax.ShapeDtypeStruct((B, nout), jnp.float32),
        grid=(pl.cdiv(B, tb),),
        in_specs=[pl.BlockSpec((tb, K), lambda i: (i, 0))] + weight_specs,
        out_specs=pl.BlockSpec((tb, nout), lambda i: (i, 0)),
        compiler_params=pltpu.CompilerParams(dimension_semantics=("parallel",)),
        cost_estimate=cost,
    )(x, w1, b1, w2, b2, w3, b3)


# ---------------------------------------------------------------------------
# Parameters (deterministic, PyTorch default-style uniform init) + one-time prep
# ---------------------------------------------------------------------------
def init_params(key):
    keys = jax.random.split(key, 10)

    def u(k, shape, fan_in):
        bound = 1.0 / float(fan_in) ** 0.5
        return jax.random.uniform(k, shape, jnp.float32, -bound, bound)

    return {
        "conv1_w": u(keys[0], (6, 1, 5, 5), 1 * 5 * 5),
        "conv1_b": u(keys[1], (6,), 1 * 5 * 5),
        "conv2_w": u(keys[2], (16, 6, 5, 5), 6 * 5 * 5),
        "conv2_b": u(keys[3], (16,), 6 * 5 * 5),
        "fc1_w":   u(keys[4], (120, 256), 256),   # PyTorch Linear: [out, in]
        "fc1_b":   u(keys[5], (120,), 256),
        "fc2_w":   u(keys[6], (84, 120), 120),
        "fc2_b":   u(keys[7], (84,), 120),
        "fc3_w":   u(keys[8], (10, 84), 84),
        "fc3_b":   u(keys[9], (10,), 84),
    }


def _prep_conv(w, b, k_pad, cout_pad):
    """Conv weight -> [Kp, Coutp] with rows in (i, j, c) order (matches the
    im2col concat order), zero-padded along K and Cout; bias -> [1, Coutp]."""
    cout, cin, kh, kw = w.shape
    k = kh * kw * cin
    w2 = w.transpose(2, 3, 1, 0).reshape(k, cout)               # [(i,j,c), Cout]
    w2 = jnp.pad(w2, ((0, k_pad - k), (0, cout_pad - cout))).astype(jnp.bfloat16)
    b2 = jnp.pad(b, (0, cout_pad - cout)).reshape(1, cout_pad).astype(jnp.float32)
    return w2, b2


def prepare_params(params):
    """One-time weight prep: reshape / permute / pad / cast so the forward pass
    has zero per-call layout ops.  fc1 columns are permuted so the NHWC flatten
    matches PyTorch's (C, H, W) .view ordering exactly; fc hidden widths are
    padded to 128 so the fused MLP's dots are lane-dense."""
    bf16, f32 = jnp.bfloat16, jnp.float32

    c1_w, c1_b = _prep_conv(params["conv1_w"], params["conv1_b"], k_pad=32, cout_pad=8)
    c2_w, c2_b = _prep_conv(params["conv2_w"], params["conv2_b"], k_pad=160, cout_pad=16)

    # my flatten order over [4,4,16] is (h, w, c); torch's over [16,4,4] is (c, h, w)
    perm = jnp.arange(256).reshape(16, 4, 4).transpose(1, 2, 0).reshape(256)

    def fc(w, b, kin_pad, kout_pad, col_perm=None):
        wt = (w if col_perm is None else w[:, col_perm]).T      # [in, out]
        kin, kout = wt.shape
        wt = jnp.pad(wt, ((0, kin_pad - kin), (0, kout_pad - kout))).astype(bf16)
        bb = jnp.pad(b, (0, kout_pad - kout)).reshape(1, kout_pad).astype(f32)
        return wt, bb

    fc1_w, fc1_b = fc(params["fc1_w"], params["fc1_b"], 256, 128, col_perm=perm)
    fc2_w, fc2_b = fc(params["fc2_w"], params["fc2_b"], 128, 128)
    fc3_w, fc3_b = fc(params["fc3_w"], params["fc3_b"], 128, 10)

    return {"c1_w": c1_w, "c1_b": c1_b, "c2_w": c2_w, "c2_b": c2_b,
            "fc1_w": fc1_w, "fc1_b": fc1_b, "fc2_w": fc2_w, "fc2_b": fc2_b,
            "fc3_w": fc3_w, "fc3_b": fc3_b}


# ---------------------------------------------------------------------------
# Forward pass (mirrors LeNet.forward)
# ---------------------------------------------------------------------------
def lenet_forward(prepared, x):
    # x: [B, 1, 28, 28] NCHW (28x28 so that 16*4*4 == 256 for fc1)
    B = x.shape[0]
    x = x.astype(jnp.bfloat16).reshape(B, 28, 28, 1)               # NCHW -> NHWC (free, Cin == 1)
    x = conv_relu_pool(x, prepared["c1_w"], prepared["c1_b"])      # [B, 12, 12, 8] (chans 6,7 are zero pad)
    x = conv_relu_pool(x, prepared["c2_w"], prepared["c2_b"], cin=6)  # [B, 4, 4, 16]
    x = x.reshape(B, 256)                                          # HWC flatten (fc1 cols pre-permuted)
    return mlp3_relu(x, prepared["fc1_w"], prepared["fc1_b"],
                     prepared["fc2_w"], prepared["fc2_b"],
                     prepared["fc3_w"], prepared["fc3_b"])         # [B, 10]


if __name__ == "__main__":
    key = jax.random.PRNGKey(0)
    k_params, k_x = jax.random.split(key)
    params = init_params(k_params)
    prepared = prepare_params(params)                              # one-time, outside the forward
    x = jax.random.normal(k_x, (2, 1, 28, 28), dtype=jnp.float32)

    out = jax.jit(lenet_forward)(prepared, x)
    out = jax.block_until_ready(out)

    assert out.shape == (2, 10)
    assert bool(jnp.all(out >= 0.0))  # final ReLU (mirrors the reference forward)
    print("KERNEL_OK")
</pallas_src>

<mosaic_0001>
module attributes {stable_mosaic.version = 11 : i64} {
  func.func @_conv_pool_kernel(%arg0: i32, %arg1: memref<4x144x32xbf16, #tpu.memory_space<vmem>>, %arg2: memref<32x8xbf16, #tpu.memory_space<vmem>>, %arg3: memref<1x8xf32, #tpu.memory_space<vmem>>, %arg4: memref<144x8xbf16, #tpu.memory_space<vmem>>) attributes {dimension_semantics = [#tpu.dimension_semantics<parallel>], iteration_bounds = array<i64: 2>, scalar_prefetch = 0 : i64, scratch_operands = 0 : i64, tpu.core_type = #tpu.core_type<tc>, window_params = [{transform_indices = @transform_0, window_bounds = array<i64: 4, 144, 32>}, {pipeline_mode = #tpu.pipeline_mode<synchronous>, transform_indices = @transform_1, window_bounds = array<i64: 32, 8>}, {pipeline_mode = #tpu.pipeline_mode<synchronous>, transform_indices = @transform_2, window_bounds = array<i64: 1, 8>}, {transform_indices = @transform_3, window_bounds = array<i64: 144, 8>}]} {
    %c0 = arith.constant 0 : index
    %c0_0 = arith.constant 0 : index
    %c0_1 = arith.constant 0 : index
    %0 = vector.load %arg1[%c0, %c0_0, %c0_1] : memref<4x144x32xbf16, #tpu.memory_space<vmem>>, vector<4x144x32xbf16>
    %1 = vector.shape_cast %0 : vector<4x144x32xbf16> to vector<576x32xbf16>
    %c0_2 = arith.constant 0 : index
    %c0_3 = arith.constant 0 : index
    %2 = vector.load %arg2[%c0_2, %c0_3] : memref<32x8xbf16, #tpu.memory_space<vmem>>, vector<32x8xbf16>
    %cst = arith.constant dense<0.000000e+00> : vector<576x8xf32>
    %3 = tpu.matmul %1, %2, %cst {dimension_numbers = #tpu.dot_dimension_numbers<[1], [0], [0], [1], [0, 0, 1, 1], [], []>} : vector<576x32xbf16>, vector<32x8xbf16>, vector<576x8xf32> -> vector<576x8xf32>
    %4 = vector.extract_strided_slice %3 {offsets = [0, 0], sizes = [144, 8], strides = [1, 1]} : vector<576x8xf32> to vector<144x8xf32>
    %5 = vector.extract_strided_slice %3 {offsets = [144, 0], sizes = [144, 8], strides = [1, 1]} : vector<576x8xf32> to vector<144x8xf32>
    %6 = arith.maximumf %4, %5 : vector<144x8xf32>
    %7 = vector.extract_strided_slice %3 {offsets = [288, 0], sizes = [144, 8], strides = [1, 1]} : vector<576x8xf32> to vector<144x8xf32>
    %8 = vector.extract_strided_slice %3 {offsets = [432, 0], sizes = [144, 8], strides = [1, 1]} : vector<576x8xf32> to vector<144x8xf32>
    %9 = arith.maximumf %7, %8 : vector<144x8xf32>
    %10 = arith.maximumf %6, %9 : vector<144x8xf32>
    %c0_4 = arith.constant 0 : index
    %c0_5 = arith.constant 0 : index
    %11 = vector.load %arg3[%c0_4, %c0_5] : memref<1x8xf32, #tpu.memory_space<vmem>>, vector<1x8xf32>
    %12 = vector.broadcast %11 : vector<1x8xf32> to vector<144x8xf32>
    %13 = arith.addf %10, %12 : vector<144x8xf32>
    %cst_6 = arith.constant 0.000000e+00 : f32
    %14 = vector.broadcast %cst_6 : f32 to vector<144x8xf32>
    %15 = arith.maximumf %13, %14 : vector<144x8xf32>
    %16 = arith.truncf %15 : vector<144x8xf32> to vector<144x8xbf16>
    %c0_7 = arith.constant 0 : index
    %c0_8 = arith.constant 0 : index
    %17 = vector.load %arg4[%c0_7, %c0_8] : memref<144x8xbf16, #tpu.memory_space<vmem>>, vector<144x8xbf16>
    tpu.vector_store %arg4[%c0_7, %c0_8], %16 {strides = array<i32>} : memref<144x8xbf16, #tpu.memory_space<vmem>>, vector<144x8xbf16>,
    return
  }
  func.func @transform_0(%arg0: i32) -> (i32, i32, i32) {
    %c0_i32 = arith.constant 0 : i32
    %c0_i32_0 = arith.constant 0 : i32
    %c0_i32_1 = arith.constant 0 : i32
    return %c0_i32, %arg0, %c0_i32_0 : i32, i32, i32
  }
  func.func @transform_1(%arg0: i32) -> (i32, i32) {
    %c0_i32 = arith.constant 0 : i32
    %c0_i32_0 = arith.constant 0 : i32
    %c0_i32_1 = arith.constant 0 : i32
    return %c0_i32, %c0_i32_0 : i32, i32
  }
  func.func @transform_2(%arg0: i32) -> (i32, i32) {
    %c0_i32 = arith.constant 0 : i32
    %c0_i32_0 = arith.constant 0 : i32
    %c0_i32_1 = arith.constant 0 : i32
    return %c0_i32, %c0_i32_0 : i32, i32
  }
  func.func @transform_3(%arg0: i32) -> (i32, i32) {
    %c0_i32 = arith.constant 0 : i32
    %c0_i32_0 = arith.constant 0 : i32
    return %arg0, %c0_i32 : i32, i32
  }
}

module attributes {stable_mosaic.version = 11 : i64} {
  func.func @_conv_pool_kernel(%arg0: i32, %arg1: memref<4x32x160xbf16, #tpu.memory_space<vmem>>, %arg2: memref<160x16xbf16, #tpu.memory_space<vmem>>, %arg3: memref<1x16xf32, #tpu.memory_space<vmem>>, %arg4: memref<32x16xbf16, #tpu.memory_space<vmem>>) attributes {dimension_semantics = [#tpu.dimension_semantics<parallel>], iteration_bounds = array<i64: 1>, scalar_prefetch = 0 : i64, scratch_operands = 0 : i64, tpu.core_type = #tpu.core_type<tc>, window_params = [{transform_indices = @transform_0, window_bounds = array<i64: 4, 32, 160>}, {pipeline_mode = #tpu.pipeline_mode<synchronous>, transform_indices = @transform_1, window_bounds = array<i64: 160, 16>}, {pipeline_mode = #tpu.pipeline_mode<synchronous>, transform_indices = @transform_2, window_bounds = array<i64: 1, 16>}, {transform_indices = @transform_3, window_bounds = array<i64: 32, 16>}]} {
    %c0 = arith.constant 0 : index
    %c0_0 = arith.constant 0 : index
    %c0_1 = arith.constant 0 : index
    %0 = vector.load %arg1[%c0, %c0_0, %c0_1] : memref<4x32x160xbf16, #tpu.memory_space<vmem>>, vector<4x32x160xbf16>
    %1 = vector.shape_cast %0 : vector<4x32x160xbf16> to vector<128x160xbf16>
    %c0_2 = arith.constant 0 : index
    %c0_3 = arith.constant 0 : index
    %2 = vector.load %arg2[%c0_2, %c0_3] : memref<160x16xbf16, #tpu.memory_space<vmem>>, vector<160x16xbf16>
    %cst = arith.constant dense<0.000000e+00> : vector<128x16xf32>
    %3 = tpu.matmul %1, %2, %cst {dimension_numbers = #tpu.dot_dimension_numbers<[1], [0], [0], [1], [0, 0, 1, 1], [], []>} : vector<128x160xbf16>, vector<160x16xbf16>, vector<128x16xf32> -> vector<128x16xf32>
    %4 = vector.extract_strided_slice %3 {offsets = [0, 0], sizes = [32, 16], strides = [1, 1]} : vector<128x16xf32> to vector<32x16xf32>
    %5 = vector.extract_strided_slice %3 {offsets = [32, 0], sizes = [32, 16], strides = [1, 1]} : vector<128x16xf32> to vector<32x16xf32>
    %6 = arith.maximumf %4, %5 : vector<32x16xf32>
    %7 = vector.extract_strided_slice %3 {offsets = [64, 0], sizes = [32, 16], strides = [1, 1]} : vector<128x16xf32> to vector<32x16xf32>
    %8 = vector.extract_strided_slice %3 {offsets = [96, 0], sizes = [32, 16], strides = [1, 1]} : vector<128x16xf32> to vector<32x16xf32>
    %9 = arith.maximumf %7, %8 : vector<32x16xf32>
    %10 = arith.maximumf %6, %9 : vector<32x16xf32>
    %c0_4 = arith.constant 0 : index
    %c0_5 = arith.constant 0 : index
    %11 = vector.load %arg3[%c0_4, %c0_5] : memref<1x16xf32, #tpu.memory_space<vmem>>, vector<1x16xf32>
    %12 = vector.broadcast %11 : vector<1x16xf32> to vector<32x16xf32>
    %13 = arith.addf %10, %12 : vector<32x16xf32>
    %cst_6 = arith.constant 0.000000e+00 : f32
    %14 = vector.broadcast %cst_6 : f32 to vector<32x16xf32>
    %15 = arith.maximumf %13, %14 : vector<32x16xf32>
    %16 = arith.truncf %15 : vector<32x16xf32> to vector<32x16xbf16>
    %c0_7 = arith.constant 0 : index
    %c0_8 = arith.constant 0 : index
    %17 = vector.load %arg4[%c0_7, %c0_8] : memref<32x16xbf16, #tpu.memory_space<vmem>>, vector<32x16xbf16>
    tpu.vector_store %arg4[%c0_7, %c0_8], %16 {strides = array<i32>} : memref<32x16xbf16, #tpu.memory_space<vmem>>, vector<32x16xbf16>,
    return
  }
  func.func @transform_0(%arg0: i32) -> (i32, i32, i32) {
    %c0_i32 = arith.constant 0 : i32
    %c0_i32_0 = arith.constant 0 : i32
    %c0_i32_1 = arith.constant 0 : i32
    return %c0_i32, %arg0, %c0_i32_0 : i32, i32, i32
  }
  func.func @transform_1(%arg0: i32) -> (i32, i32) {
    %c0_i32 = arith.constant 0 : i32
    %c0_i32_0 = arith.constant 0 : i32
    %c0_i32_1 = arith.constant 0 : i32
    return %c0_i32, %c0_i32_0 : i32, i32
  }
  func.func @transform_2(%arg0: i32) -> (i32, i32) {
    %c0_i32 = arith.constant 0 : i32
    %c0_i32_0 = arith.constant 0 : i32
    %c0_i32_1 = arith.constant 0 : i32
    return %c0_i32, %c0_i32_0 : i32, i32
  }
  func.func @transform_3(%arg0: i32) -> (i32, i32) {
    %c0_i32 = arith.constant 0 : i32
    %c0_i32_0 = arith.constant 0 : i32
    return %arg0, %c0_i32 : i32, i32
  }
}

module attributes {stable_mosaic.version = 11 : i64} {
  func.func @_mlp3_kernel(%arg0: i32, %arg1: memref<2x256xbf16, #tpu.memory_space<vmem>>, %arg2: memref<256x128xbf16, #tpu.memory_space<vmem>>, %arg3: memref<1x128xf32, #tpu.memory_space<vmem>>, %arg4: memref<128x128xbf16, #tpu.memory_space<vmem>>, %arg5: memref<1x128xf32, #tpu.memory_space<vmem>>, %arg6: memref<128x10xbf16, #tpu.memory_space<vmem>>, %arg7: memref<1x10xf32, #tpu.memory_space<vmem>>, %arg8: memref<2x10xf32, #tpu.memory_space<vmem>>) attributes {dimension_semantics = [#tpu.dimension_semantics<parallel>], iteration_bounds = array<i64: 1>, scalar_prefetch = 0 : i64, scratch_operands = 0 : i64, tpu.core_type = #tpu.core_type<tc>, window_params = [{transform_indices = @transform_0, window_bounds = array<i64: 2, 256>}, {pipeline_mode = #tpu.pipeline_mode<synchronous>, transform_indices = @transform_1, window_bounds = array<i64: 256, 128>}, {pipeline_mode = #tpu.pipeline_mode<synchronous>, transform_indices = @transform_2, window_bounds = array<i64: 1, 128>}, {pipeline_mode = #tpu.pipeline_mode<synchronous>, transform_indices = @transform_3, window_bounds = array<i64: 128, 128>}, {pipeline_mode = #tpu.pipeline_mode<synchronous>, transform_indices = @transform_4, window_bounds = array<i64: 1, 128>}, {pipeline_mode = #tpu.pipeline_mode<synchronous>, transform_indices = @transform_5, window_bounds = array<i64: 128, 10>}, {pipeline_mode = #tpu.pipeline_mode<synchronous>, transform_indices = @transform_6, window_bounds = array<i64: 1, 10>}, {transform_indices = @transform_7, window_bounds = array<i64: 2, 10>}]} {
    %c0 = arith.constant 0 : index
    %c0_0 = arith.constant 0 : index
    %0 = vector.load %arg1[%c0, %c0_0] : memref<2x256xbf16, #tpu.memory_space<vmem>>, vector<2x256xbf16>
    %c0_1 = arith.constant 0 : index
    %c0_2 = arith.constant 0 : index
    %1 = vector.load %arg2[%c0_1, %c0_2] : memref<256x128xbf16, #tpu.memory_space<vmem>>, vector<256x128xbf16>
    %cst = arith.constant dense<0.000000e+00> : vector<2x128xf32>
    %2 = tpu.matmul %0, %1, %cst {dimension_numbers = #tpu.dot_dimension_numbers<[1], [0], [0], [1], [0, 0, 1, 1], [], []>} : vector<2x256xbf16>, vector<256x128xbf16>, vector<2x128xf32> -> vector<2x128xf32>
    %c0_3 = arith.constant 0 : index
    %c0_4 = arith.constant 0 : index
    %3 = vector.load %arg3[%c0_3, %c0_4] : memref<1x128xf32, #tpu.memory_space<vmem>>, vector<1x128xf32>
    %4 = vector.broadcast %3 : vector<1x128xf32> to vector<2x128xf32>
    %5 = arith.addf %2, %4 : vector<2x128xf32>
    %cst_5 = arith.constant 0.000000e+00 : f32
    %6 = vector.broadcast %cst_5 : f32 to vector<2x128xf32>
    %7 = arith.maximumf %5, %6 : vector<2x128xf32>
    %8 = arith.truncf %7 : vector<2x128xf32> to vector<2x128xbf16>
    %c0_6 = arith.constant 0 : index
    %c0_7 = arith.constant 0 : index
    %9 = vector.load %arg4[%c0_6, %c0_7] : memref<128x128xbf16, #tpu.memory_space<vmem>>, vector<128x128xbf16>
    %cst_8 = arith.constant dense<0.000000e+00> : vector<2x128xf32>
    %10 = tpu.matmul %8, %9, %cst_8 {dimension_numbers = #tpu.dot_dimension_numbers<[1], [0], [0], [1], [0, 0, 1, 1], [], []>} : vector<2x128xbf16>, vector<128x128xbf16>, vector<2x128xf32> -> vector<2x128xf32>
    %c0_9 = arith.constant 0 : index
    %c0_10 = arith.constant 0 : index
    %11 = vector.load %arg5[%c0_9, %c0_10] : memref<1x128xf32, #tpu.memory_space<vmem>>, vector<1x128xf32>
    %12 = vector.broadcast %11 : vector<1x128xf32> to vector<2x128xf32>
    %13 = arith.addf %10, %12 : vector<2x128xf32>
    %cst_11 = arith.constant 0.000000e+00 : f32
    %14 = vector.broadcast %cst_11 : f32 to vector<2x128xf32>
    %15 = arith.maximumf %13, %14 : vector<2x128xf32>
    %16 = arith.truncf %15 : vector<2x128xf32> to vector<2x128xbf16>
    %c0_12 = arith.constant 0 : index
    %c0_13 = arith.constant 0 : index
    %17 = vector.load %arg6[%c0_12, %c0_13] : memref<128x10xbf16, #tpu.memory_space<vmem>>, vector<128x10xbf16>
    %cst_14 = arith.constant dense<0.000000e+00> : vector<2x10xf32>
    %18 = tpu.matmul %16, %17, %cst_14 {dimension_numbers = #tpu.dot_dimension_numbers<[1], [0], [0], [1], [0, 0, 1, 1], [], []>} : vector<2x128xbf16>, vector<128x10xbf16>, vector<2x10xf32> -> vector<2x10xf32>
    %c0_15 = arith.constant 0 : index
    %c0_16 = arith.constant 0 : index
    %19 = vector.load %arg7[%c0_15, %c0_16] : memref<1x10xf32, #tpu.memory_space<vmem>>, vector<1x10xf32>
    %20 = vector.broadcast %19 : vector<1x10xf32> to vector<2x10xf32>
    %21 = arith.addf %18, %20 : vector<2x10xf32>
    %cst_17 = arith.constant 0.000000e+00 : f32
    %22 = vector.broadcast %cst_17 : f32 to vector<2x10xf32>
    %23 = arith.maximumf %21, %22 : vector<2x10xf32>
    %c0_18 = arith.constant 0 : index
    %c0_19 = arith.constant 0 : index
    %24 = vector.load %arg8[%c0_18, %c0_19] : memref<2x10xf32, #tpu.memory_space<vmem>>, vector<2x10xf32>
    tpu.vector_store %arg8[%c0_18, %c0_19], %23 {strides = array<i32>} : memref<2x10xf32, #tpu.memory_space<vmem>>, vector<2x10xf32>,
    return
  }
  func.func @transform_0(%arg0: i32) -> (i32, i32) {
    %c0_i32 = arith.constant 0 : i32
    %c0_i32_0 = arith.constant 0 : i32
    return %arg0, %c0_i32 : i32, i32
  }
  func.func @transform_1(%arg0: i32) -> (i32, i32) {
    %c0_i32 = arith.constant 0 : i32
    %c0_i32_0 = arith.constant 0 : i32
    %c0_i32_1 = arith.constant 0 : i32
    return %c0_i32, %c0_i32_0 : i32, i32
  }
  func.func @transform_2(%arg0: i32) -> (i32, i32) {
    %c0_i32 = arith.constant 0 : i32
    %c0_i32_0 = arith.constant 0 : i32
    %c0_i32_1 = arith.constant 0 : i32
    return %c0_i32, %c0_i32_0 : i32, i32
  }
  func.func @transform_3(%arg0: i32) -> (i32, i32) {
    %c0_i32 = arith.constant 0 : i32
    %c0_i32_0 = arith.constant 0 : i32
    %c0_i32_1 = arith.constant 0 : i32
    return %c0_i32, %c0_i32_0 : i32, i32
  }
  func.func @transform_4(%arg0: i32) -> (i32, i32) {
    %c0_i32 = arith.constant 0 : i32
    %c0_i32_0 = arith.constant 0 : i32
    %c0_i32_1 = arith.constant 0 : i32
    return %c0_i32, %c0_i32_0 : i32, i32
  }
  func.func @transform_5(%arg0: i32) -> (i32, i32) {
    %c0_i32 = arith.constant 0 : i32
    %c0_i32_0 = arith.constant 0 : i32
    %c0_i32_1 = arith.constant 0 : i32
    return %c0_i32, %c0_i32_0 : i32, i32
  }
  func.func @transform_6(%arg0: i32) -> (i32, i32) {
    %c0_i32 = arith.constant 0 : i32
    %c0_i32_0 = arith.constant 0 : i32
    %c0_i32_1 = arith.constant 0 : i32
    return %c0_i32, %c0_i32_0 : i32, i32
  }
  func.func @transform_7(%arg0: i32) -> (i32, i32) {
    %c0_i32 = arith.constant 0 : i32
    %c0_i32_0 = arith.constant 0 : i32
    return %arg0, %c0_i32 : i32, i32
  }
}

</mosaic_0001>

<llo_original>
// kernel: lenet_forward.3
$region0: #{lenet_forward.3}
  #allocation0 [shape = 'u32[]', space=smem, size = 0x4, offset = 0x4, fixed_abs, tag = 'smem constant byte address 0x4 - core index']
  #allocation1 [shape = 'u32[144,128]{1,0:T(1,128)}', space=vmem, size = 0x12000, scoped, tag = 'internal scratch']
  %s0 = inlined_call_operand.vmem [shape: bf16[4,288,32], index: 0, kind: input, shape index: {}]
  %s1 = inlined_call_operand.vmem [shape: bf16[32,8], index: 1, kind: input, shape index: {}]
  %s2 = inlined_call_operand.vmem [shape: f32[1,8], index: 2, kind: input, shape index: {}]
  %s3 = inlined_call_operand.vmem [shape: bf16[288,8], index: 3, kind: output, shape index: {}]
  %s4 = sld [smem:[#allocation0]]
  $region86: #{lenet_forward.3} parent=0
    _
  %s6 = ssub.s32 1, %s4
  %s7 = scalar_select 0, %s6, %s4
  $region1: #{lenet_forward.3} parent=0
    #allocation2 [shape = 'u8[294912]{0}', space=vmem, size = 0x48000, scoped, tag = 'input window, operand 0']
    loop: start=0, step=1, limit=4
    $region2: #{lenet_forward.3} parent=1 // loop_pre_header
      _
    $region3: #{lenet_forward.3} parent=1 // loop_header
      %s9 = sphi 0, %s13
      %p10 = scmp.ge.s32.totalorder %s9, 4
      %s19 = sphi 0, %s21
      %s22 = sphi 0, %s19
      %s23 = sphi 0, %s22
      %s39 = sphi 0, %s23
      %s43 = sphi 0, %s43
      %s45 = sphi 0, %s43
      %s46 = sphi 0, %s45
      %s60 = sphi 0, %s46
      %s64 = sphi 0, %s64
      %s66 = sphi 0, %s64
      %s67 = sphi 0, %s66
      %s81 = sphi 0, %s67
      %s87 = sphi 0, %s89
      %s90 = sphi 0, %s87
      %s91 = sphi 0, %s90
      %s107 = sphi 0, %s91
    $region4: #{lenet_forward.3} parent=1 // loop_header_branch
      %12 = sbr.rel (%p10) target = $region8
    $region5: #{lenet_forward.3} parent=1 // loop_body
      %s14 = ssub.s32 %s9, 1
      %s15 = ssub.s32 %s9, 2
      %s16 = sadd.s32 %s9, 1
      %s17 = ssub.s32 %s9, %s16
      %p18 = scmp.eq.s32.totalorder %s17, 0
      %s20 = sadd.s32 %s19, 1
      %s21 = scalar_select %p18, %s19, %s20
      %p24 = pneg %p18
      %p25 = scmp.eq.s32.totalorder %s9, 1
      %p26 = por %p24, %p25
      %p27 = scmp.ne.s32.totalorder %s19, %s22
      %p28 = scmp.eq.s32.totalorder %s9, 0
      %p29 = por %p27, %p28
      %p30 = scmp.ne.s32.totalorder %s19, %s22
      %p31 = scmp.eq.s32.totalorder %s14, 1
      %p32 = por %p30, %p31
      %p33 = scmp.ne.s32.totalorder %s22, %s23
      %p34 = scmp.eq.s32.totalorder %s14, 0
      %p35 = por %p33, %p34
      %p36 = scmp.ne.s32.totalorder %s22, %s23
      %p37 = scmp.eq.s32.totalorder %s15, 1
      %p38 = por %p36, %p37
      %p40 = scmp.ne.s32.totalorder %s23, %s39
      %p41 = scmp.eq.s32.totalorder %s15, 0
      %p42 = por %p40, %p41
      %s44 = sadd.s32 %s43, 1
      %p47 = scmp.eq.s32.totalorder %s9, 1
      %p48 = scmp.ne.s32.totalorder %s43, %s45
      %p49 = scmp.eq.s32.totalorder %s9, 0
      %p50 = por %p48, %p49
      %p51 = scmp.ne.s32.totalorder %s43, %s45
      %p52 = scmp.eq.s32.totalorder %s14, 1
      %p53 = por %p51, %p52
      %p54 = scmp.ne.s32.totalorder %s45, %s46
      %p55 = scmp.eq.s32.totalorder %s14, 0
      %p56 = por %p54, %p55
      %p57 = scmp.ne.s32.totalorder %s45, %s46
      %p58 = scmp.eq.s32.totalorder %s15, 1
      %p59 = por %p57, %p58
      %p61 = scmp.ne.s32.totalorder %s46, %s60
      %p62 = scmp.eq.s32.totalorder %s15, 0
      %p63 = por %p61, %p62
      %s65 = sadd.s32 %s64, 1
      %p68 = scmp.eq.s32.totalorder %s9, 1
      %p69 = scmp.ne.s32.totalorder %s64, %s66
      %p70 = scmp.eq.s32.totalorder %s9, 0
      %p71 = por %p69, %p70
      %p72 = scmp.ne.s32.totalorder %s64, %s66
      %p73 = scmp.eq.s32.totalorder %s14, 1
      %p74 = por %p72, %p73
      %p75 = scmp.ne.s32.totalorder %s66, %s67
      %p76 = scmp.eq.s32.totalorder %s14, 0
      %p77 = por %p75, %p76
      %p78 = scmp.ne.s32.totalorder %s66, %s67
      %p79 = scmp.eq.s32.totalorder %s15, 1
      %p80 = por %p78, %p79
      %p82 = scmp.ne.s32.totalorder %s67, %s81
      %p83 = scmp.eq.s32.totalorder %s15, 0
      %p84 = por %p82, %p83
      %s85 = ssub.s32 %s9, %s16
      %p86 = scmp.eq.s32.totalorder %s85, 0
      %s88 = sadd.s32 %s87, 1
      %s89 = scalar_select %p86, %s87, %s88
      %p92 = pneg %p86
      %p93 = scmp.eq.s32.totalorder %s9, 1
      %p94 = por %p92, %p93
      %p95 = scmp.ne.s32.totalorder %s87, %s90
      %p96 = scmp.eq.s32.totalorder %s9, 0
      %p97 = por %p95, %p96
      %p98 = scmp.ne.s32.totalorder %s87, %s90
      %p99 = scmp.eq.s32.totalorder %s14, 1
      %p100 = por %p98, %p99
      %p101 = scmp.ne.s32.totalorder %s90, %s91
      %p102 = scmp.eq.s32.totalorder %s14, 0
      %p103 = por %p101, %p102
      %p104 = scmp.ne.s32.totalorder %s90, %s91
      %p105 = scmp.eq.s32.totalorder %s15, 1
      %p106 = por %p104, %p105
      %p108 = scmp.ne.s32.totalorder %s91, %s107
      %p109 = scmp.eq.s32.totalorder %s15, 0
      %p110 = por %p108, %p109
      %p111 = scmp.le.s32.totalorder 1, %s9
      %p112 = scmp.lt.s32.totalorder %s9, 3
      %p113 = pnand %p111, %p112
      %p114 = pneg %p113
      // Predicated region
      $region9: #{lenet_forward.3} parent=5 // pred_check
        _
      $region10: #{lenet_forward.3} parent=5 // pred_check_branch
        %116 = sbr.rel (%p113) target = $region12
      $region11: #{lenet_forward.3} parent=5 // pred_region
        %s117 = ssub.s32 %s9, 1
        // Predicated region
        $region13: #{lenet_forward.3} parent=11 // pred_check
          %p118 = pneg %p56
        $region14: #{lenet_forward.3} parent=11 // pred_check_branch
          %120 = sbr.rel (%p118) target = $region16
        $region15: #{lenet_forward.3} parent=11 // pred_region
          _
        $region16: #{lenet_forward.3} parent=11 // pred_fallthru
          _
        // Predicated region
        $region17: #{lenet_forward.3} parent=11 // pred_check
          %p121 = pneg %p77
        $region18: #{lenet_forward.3} parent=11 // pred_check_branch
          %123 = sbr.rel (%p121) target = $region20
        $region19: #{lenet_forward.3} parent=11 // pred_region
          _
        $region20: #{lenet_forward.3} parent=11 // pred_fallthru
          _
      $region12: #{lenet_forward.3} parent=5 // pred_fallthru
        _
      %p124 = scmp.lt.s32.totalorder %s9, 2
      // Predicated region
      $region21: #{lenet_forward.3} parent=5 // pred_check
        %p125 = pneg %p124
      $region22: #{lenet_forward.3} parent=5 // pred_check_branch
        %127 = sbr.rel (%p125) target = $region24
      $region23: #{lenet_forward.3} parent=5 // pred_region
        // Predicated region
        $region25: #{lenet_forward.3} parent=23 // pred_check
          %p128 = pneg %p29
        $region26: #{lenet_forward.3} parent=23 // pred_check_branch
          %130 = sbr.rel (%p128) target = $region28
        $region27: #{lenet_forward.3} parent=23 // pred_region
          %s131 = sand.u32 %s19, 1
          %s132 = sand.u32 %s19, 1
          %s133 = smul.addr %s132, 288
          %s134 = scalar_lea.vmem [#allocation2], %s133
          %s135 = smul.u32 18, %s9
          %s136 = smul.addr %s135, 4
          %s137 = scalar_lea.vmem %s0, %s136
          // Predicated region
          $region29: #{lenet_forward.3} parent=27 // pred_check
            _
          $region30: #{lenet_forward.3} parent=27 // pred_check_branch
            %139 = sbr.rel (0) target = $region32
          $region31: #{lenet_forward.3} parent=27 // pred_region
            // Predicated region
            $region33: #{lenet_forward.3} parent=31 // pred_check
              _
            $region34: #{lenet_forward.3} parent=31 // pred_check_branch
              %141 = sbr.rel target = $region36
            $region35: #{lenet_forward.3} parent=31 // pred_region
              // Predicated region
              $region48: #{lenet_forward.3} parent=35 // pred_check
                _
              $region49: #{lenet_forward.3} parent=35 // pred_check_branch
                %299 = sbr.rel (0) target = $region51
              $region50: #{lenet_forward.3} parent=35 // pred_region
                loop: start=0, step=1, limit=1
                $region52: #{lenet_forward.3} parent=50 // loop_pre_header
                  _
                $region53: #{lenet_forward.3} parent=50 // loop_header
                  %s301 = sphi 0, %s305
                  %p302 = scmp.ge.s32.totalorder %s301, 1
                  %s306 = sphi %s137, %s137
                  %s307 = sphi %s134, %s134
                $region54: #{lenet_forward.3} parent=50 // loop_header_branch
                  %304 = sbr.rel (%p302) target = $region58
                $region55: #{lenet_forward.3} parent=50 // loop_body
                  _
                $region56: #{lenet_forward.3} parent=50 // loop_footer
                  %s305 = sadd.s32 1, %s301
                $region57: #{lenet_forward.3} parent=50 // loop_footer_branch
                  %300 = sbr.rel target = $region53
                $region58: #{lenet_forward.3} parent=50 // loop_exit
                  _
                %s309 = ssub.s32 16, 1
                loop: start=0, step=1, limit=1
                $region59: #{lenet_forward.3} parent=50 // loop_pre_header
                  _
                $region60: #{lenet_forward.3} parent=50 // loop_header
                  %s311 = sphi 0, %s315
                  %p312 = scmp.ge.s32.totalorder %s311, 1
                  %s316 = sphi %s137, %s137
                  %s317 = sphi %s134, %s134
                $region61: #{lenet_forward.3} parent=50 // loop_header_branch
                  %314 = sbr.rel (%p312) target = $region65
                $region62: #{lenet_forward.3} parent=50 // loop_body
                  %v318 = vld [vmem:[%s316] sm:%s309]
                  %319 = vst [vmem:[%s317] sm:%s309] %v318
                  %v320 = vld [vmem:[%s316 + $0x4] sm:%s309]
                  %321 = vst [vmem:[%s317 + $0x4] sm:%s309] %v320
                  %v322 = vld [vmem:[%s316 + $0x8] sm:%s309]
                  %323 = vst [vmem:[%s317 + $0x8] sm:%s309] %v322
                  %v324 = vld [vmem:[%s316 + $0xc] sm:%s309]
                  %325 = vst [vmem:[%s317 + $0xc] sm:%s309] %v324
                  %v326 = vld [vmem:[%s316 + $0x10] sm:%s309]
                  %327 = vst [vmem:[%s317 + $0x10] sm:%s309] %v326
                  %v328 = vld [vmem:[%s316 + $0x14] sm:%s309]
                  %329 = vst [vmem:[%s317 + $0x14] sm:%s309] %v328
                  %v330 = vld [vmem:[%s316 + $0x18] sm:%s309]
                  %331 = vst [vmem:[%s317 + $0x18] sm:%s309] %v330
                  %v332 = vld [vmem:[%s316 + $0x1c] sm:%s309]
                  %333 = vst [vmem:[%s317 + $0x1c] sm:%s309] %v332
                  %v334 = vld [vmem:[%s316 + $0x20] sm:%s309]
                  %335 = vst [vmem:[%s317 + $0x20] sm:%s309] %v334
                  %v336 = vld [vmem:[%s316 + $0x24] sm:%s309]
                  %337 = vst [vmem:[%s317 + $0x24] sm:%s309] %v336
                  %v338 = vld [vmem:[%s316 + $0x28] sm:%s309]
                  %339 = vst [vmem:[%s317 + $0x28] sm:%s309] %v338
                  %v340 = vld [vmem:[%s316 + $0x2c] sm:%s309]
                  %341 = vst [vmem:[%s317 + $0x2c] sm:%s309] %v340
                  %v342 = vld [vmem:[%s316 + $0x30] sm:%s309]
                  %343 = vst [vmem:[%s317 + $0x30] sm:%s309] %v342
                  %v344 = vld [vmem:[%s316 + $0x34] sm:%s309]
                  %345 = vst [vmem:[%s317 + $0x34] sm:%s309] %v344
                  %v346 = vld [vmem:[%s316 + $0x38] sm:%s309]
                  %347 = vst [vmem:[%s317 + $0x38] sm:%s309] %v346
                  %v348 = vld [vmem:[%s316 + $0x3c] sm:%s309]
                  %349 = vst [vmem:[%s317 + $0x3c] sm:%s309] %v348
                  %v350 = vld [vmem:[%s316 + $0x40] sm:%s309]
                  %351 = vst [vmem:[%s317 + $0x40] sm:%s309] %v350
                  %v352 = vld [vmem:[%s316 + $0x44] sm:%s309]
                  %353 = vst [vmem:[%s317 + $0x44] sm:%s309] %v352
                  %v354 = vld [vmem:[%s316 + $0x90] sm:%s309]
                  %355 = vst [vmem:[%s317 + $0x48] sm:%s309] %v354
                  %v356 = vld [vmem:[%s316 + $0x94] sm:%s309]
                  %357 = vst [vmem:[%s317 + $0x4c] sm:%s309] %v356
                  %v358 = vld [vmem:[%s316 + $0x98] sm:%s309]
                  %359 = vst [vmem:[%s317 + $0x50] sm:%s309] %v358
                  %v360 = vld [vmem:[%s316 + $0x9c] sm:%s309]
                  %361 = vst [vmem:[%s317 + $0x54] sm:%s309] %v360
                  %v362 = vld [vmem:[%s316 + $0xa0] sm:%s309]
                  %363 = vst [vmem:[%s317 + $0x58] sm:%s309] %v362
                  %v364 = vld [vmem:[%s316 + $0xa4] sm:%s309]
                  %365 = vst [vmem:[%s317 + $0x5c] sm:%s309] %v364
                  %v366 = vld [vmem:[%s316 + $0xa8] sm:%s309]
                  %367 = vst [vmem:[%s317 + $0x60] sm:%s309] %v366
                  %v368 = vld [vmem:[%s316 + $0xac] sm:%s309]
                  %369 = vst [vmem:[%s317 + $0x64] sm:%s309] %v368
                  %v370 = vld [vmem:[%s316 + $0xb0] sm:%s309]
                  %371 = vst [vmem:[%s317 + $0x68] sm:%s309] %v370
                  %v372 = vld [vmem:[%s316 + $0xb4] sm:%s309]
                  %373 = vst [vmem:[%s317 + $0x6c] sm:%s309] %v372
                  %v374 = vld [vmem:[%s316 + $0xb8] sm:%s309]
                  %375 = vst [vmem:[%s317 + $0x70] sm:%s309] %v374
                  %v376 = vld [vmem:[%s316 + $0xbc] sm:%s309]
                  %377 = vst [vmem:[%s317 + $0x74] sm:%s309] %v376
                  %v378 = vld [vmem:[%s316 + $0xc0] sm:%s309]
                  %379 = vst [vmem:[%s317 + $0x78] sm:%s309] %v378
                  %v380 = vld [vmem:[%s316 + $0xc4] sm:%s309]
                  %381 = vst [vmem:[%s317 + $0x7c] sm:%s309] %v380
                  %v382 = vld [vmem:[%s316 + $0xc8] sm:%s309]
                  %383 = vst [vmem:[%s317 + $0x80] sm:%s309] %v382
                  %v384 = vld [vmem:[%s316 + $0xcc] sm:%s309]
                  %385 = vst [vmem:[%s317 + $0x84] sm:%s309] %v384
                  %v386 = vld [vmem:[%s316 + $0xd0] sm:%s309]
                  %387 = vst [vmem:[%s317 + $0x88] sm:%s309] %v386
                  %v388 = vld [vmem:[%s316 + $0xd4] sm:%s309]
                  %389 = vst [vmem:[%s317 + $0x8c] sm:%s309] %v388
                  %v390 = vld [vmem:[%s316 + $0x120] sm:%s309]
                  %391 = vst [vmem:[%s317 + $0x90] sm:%s309] %v390
                  %v392 = vld [vmem:[%s316 + $0x124] sm:%s309]
                  %393 = vst [vmem:[%s317 + $0x94] sm:%s309] %v392
                  %v394 = vld [vmem:[%s316 + $0x128] sm:%s309]
                  %395 = vst [vmem:[%s317 + $0x98] sm:%s309] %v394
                  %v396 = vld [vmem:[%s316 + $0x12c] sm:%s309]
                  %397 = vst [vmem:[%s317 + $0x9c] sm:%s309] %v396
                  %v398 = vld [vmem:[%s316 + $0x130] sm:%s309]
                  %399 = vst [vmem:[%s317 + $0xa0] sm:%s309] %v398
                  %v400 = vld [vmem:[%s316 + $0x134] sm:%s309]
                  %401 = vst [vmem:[%s317 + $0xa4] sm:%s309] %v400
                  %v402 = vld [vmem:[%s316 + $0x138] sm:%s309]
                  %403 = vst [vmem:[%s317 + $0xa8] sm:%s309] %v402
                  %v404 = vld [vmem:[%s316 + $0x13c] sm:%s309]
                  %405 = vst [vmem:[%s317 + $0xac] sm:%s309] %v404
                  %v406 = vld [vmem:[%s316 + $0x140] sm:%s309]
                  %407 = vst [vmem:[%s317 + $0xb0] sm:%s309] %v406
                  %v408 = vld [vmem:[%s316 + $0x144] sm:%s309]
                  %409 = vst [vmem:[%s317 + $0xb4] sm:%s309] %v408
                  %v410 = vld [vmem:[%s316 + $0x148] sm:%s309]
                  %411 = vst [vmem:[%s317 + $0xb8] sm:%s309] %v410
                  %v412 = vld [vmem:[%s316 + $0x14c] sm:%s309]
                  %413 = vst [vmem:[%s317 + $0xbc] sm:%s309] %v412
                  %v414 = vld [vmem:[%s316 + $0x150] sm:%s309]
                  %415 = vst [vmem:[%s317 + $0xc0] sm:%s309] %v414
                  %v416 = vld [vmem:[%s316 + $0x154] sm:%s309]
                  %417 = vst [vmem:[%s317 + $0xc4] sm:%s309] %v416
                  %v418 = vld [vmem:[%s316 + $0x158] sm:%s309]
                  %419 = vst [vmem:[%s317 + $0xc8] sm:%s309] %v418
                  %v420 = vld [vmem:[%s316 + $0x15c] sm:%s309]
                  %421 = vst [vmem:[%s317 + $0xcc] sm:%s309] %v420
                  %v422 = vld [vmem:[%s316 + $0x160] sm:%s309]
                  %423 = vst [vmem:[%s317 + $0xd0] sm:%s309] %v422
                  %v424 = vld [vmem:[%s316 + $0x164] sm:%s309]
                  %425 = vst [vmem:[%s317 + $0xd4] sm:%s309] %v424
                  %v426 = vld [vmem:[%s316 + $0x1b0] sm:%s309]
                  %427 = vst [vmem:[%s317 + $0xd8] sm:%s309] %v426
                  %v428 = vld [vmem:[%s316 + $0x1b4] sm:%s309]
                  %429 = vst [vmem:[%s317 + $0xdc] sm:%s309] %v428
                  %v430 = vld [vmem:[%s316 + $0x1b8] sm:%s309]
                  %431 = vst [vmem:[%s317 + $0xe0] sm:%s309] %v430
                  %v432 = vld [vmem:[%s316 + $0x1bc] sm:%s309]
                  %433 = vst [vmem:[%s317 + $0xe4] sm:%s309] %v432
                  %v434 = vld [vmem:[%s316 + $0x1c0] sm:%s309]
                  %435 = vst [vmem:[%s317 + $0xe8] sm:%s309] %v434
                  %v436 = vld [vmem:[%s316 + $0x1c4] sm:%s309]
                  %437 = vst [vmem:[%s317 + $0xec] sm:%s309] %v436
                  %v438 = vld [vmem:[%s316 + $0x1c8] sm:%s309]
                  %439 = vst [vmem:[%s317 + $0xf0] sm:%s309] %v438
                  %v440 = vld [vmem:[%s316 + $0x1cc] sm:%s309]
                  %441 = vst [vmem:[%s317 + $0xf4] sm:%s309] %v440
                  %v442 = vld [vmem:[%s316 + $0x1d0] sm:%s309]
                  %443 = vst [vmem:[%s317 + $0xf8] sm:%s309] %v442
                  %v444 = vld [vmem:[%s316 + $0x1d4] sm:%s309]
                  %445 = vst [vmem:[%s317 + $0xfc] sm:%s309] %v444
                  %v446 = vld [vmem:[%s316 + $0x1d8] sm:%s309]
                  %447 = vst [vmem:[%s317 + $0x100] sm:%s309] %v446
                  %v448 = vld [vmem:[%s316 + $0x1dc] sm:%s309]
                  %449 = vst [vmem:[%s317 + $0x104] sm:%s309] %v448
                  %v450 = vld [vmem:[%s316 + $0x1e0] sm:%s309]
                  %451 = vst [vmem:[%s317 + $0x108] sm:%s309] %v450
                  %v452 = vld [vmem:[%s316 + $0x1e4] sm:%s309]
                  %453 = vst [vmem:[%s317 + $0x10c] sm:%s309] %v452
                  %v454 = vld [vmem:[%s316 + $0x1e8] sm:%s309]
                  %455 = vst [vmem:[%s317 + $0x110] sm:%s309] %v454
                  %v456 = vld [vmem:[%s316 + $0x1ec] sm:%s309]
                  %457 = vst [vmem:[%s317 + $0x114] sm:%s309] %v456
                  %v458 = vld [vmem:[%s316 + $0x1f0] sm:%s309]
                  %459 = vst [vmem:[%s317 + $0x118] sm:%s309] %v458
                  %v460 = vld [vmem:[%s316 + $0x1f4] sm:%s309]
                  %461 = vst [vmem:[%s317 + $0x11c] sm:%s309] %v460
                $region63: #{lenet_forward.3} parent=50 // loop_footer
                  %s315 = sadd.s32 1, %s311
                $region64: #{lenet_forward.3} parent=50 // loop_footer_branch
                  %310 = sbr.rel target = $region60
                $region65: #{lenet_forward.3} parent=50 // loop_exit
                  _
              $region51: #{lenet_forward.3} parent=35 // pred_fallthru
                _
            $region36: #{lenet_forward.3} parent=31 // pred_fallthru
              _
            // Predicated region
            $region37: #{lenet_forward.3} parent=31 // pred_check
              _
            $region38: #{lenet_forward.3} parent=31 // pred_check_branch
              %143 = sbr.rel (0) target = $region40
            $region39: #{lenet_forward.3} parent=31 // pred_region
              %s145 = ssub.s32 16, 1
              loop: start=0, step=1, limit=1
              $region41: #{lenet_forward.3} parent=39 // loop_pre_header
                _
              $region42: #{lenet_forward.3} parent=39 // loop_header
                %s147 = sphi 0, %s151
                %p148 = scmp.ge.s32.totalorder %s147, 1
                %s152 = sphi %s137, %s137
                %s153 = sphi %s134, %s134
              $region43: #{lenet_forward.3} parent=39 // loop_header_branch
                %150 = sbr.rel (%p148) target = $region47
              $region44: #{lenet_forward.3} parent=39 // loop_body
                %v154 = vld [vmem:[%s152] sm:%s145]
                %155 = vst [vmem:[%s153] sm:%s145] %v154
                %v156 = vld [vmem:[%s152 + $0x4] sm:%s145]
                %157 = vst [vmem:[%s153 + $0x4] sm:%s145] %v156
                %v158 = vld [vmem:[%s152 + $0x8] sm:%s145]
                %159 = vst [vmem:[%s153 + $0x8] sm:%s145] %v158
                %v160 = vld [vmem:[%s152 + $0xc] sm:%s145]
                %161 = vst [vmem:[%s153 + $0xc] sm:%s145] %v160
                %v162 = vld [vmem:[%s152 + $0x10] sm:%s145]
                %163 = vst [vmem:[%s153 + $0x10] sm:%s145] %v162
                %v164 = vld [vmem:[%s152 + $0x14] sm:%s145]
                %165 = vst [vmem:[%s153 + $0x14] sm:%s145] %v164
                %v166 = vld [vmem:[%s152 + $0x18] sm:%s145]
                %167 = vst [vmem:[%s153 + $0x18] sm:%s145] %v166
                %v168 = vld [vmem:[%s152 + $0x1c] sm:%s145]
                %169 = vst [vmem:[%s153 + $0x1c] sm:%s145] %v168
                %v170 = vld [vmem:[%s152 + $0x20] sm:%s145]
                %171 = vst [vmem:[%s153 + $0x20] sm:%s145] %v170
                %v172 = vld [vmem:[%s152 + $0x24] sm:%s145]
                %173 = vst [vmem:[%s153 + $0x24] sm:%s145] %v172
                %v174 = vld [vmem:[%s152 + $0x28] sm:%s145]
                %175 = vst [vmem:[%s153 + $0x28] sm:%s145] %v174
                %v176 = vld [vmem:[%s152 + $0x2c] sm:%s145]
                %177 = vst [vmem:[%s153 + $0x2c] sm:%s145] %v176
                %v178 = vld [vmem:[%s152 + $0x30] sm:%s145]
                %179 = vst [vmem:[%s153 + $0x30] sm:%s145] %v178
                %v180 = vld [vmem:[%s152 + $0x34] sm:%s145]
                %181 = vst [vmem:[%s153 + $0x34] sm:%s145] %v180
                %v182 = vld [vmem:[%s152 + $0x38] sm:%s145]
                %183 = vst [vmem:[%s153 + $0x38] sm:%s145] %v182
                %v184 = vld [vmem:[%s152 + $0x3c] sm:%s145]
                %185 = vst [vmem:[%s153 + $0x3c] sm:%s145] %v184
                %v186 = vld [vmem:[%s152 + $0x40] sm:%s145]
                %187 = vst [vmem:[%s153 + $0x40] sm:%s145] %v186
                %v188 = vld [vmem:[%s152 + $0x44] sm:%s145]
                %189 = vst [vmem:[%s153 + $0x44] sm:%s145] %v188
                %v190 = vld [vmem:[%s152 + $0x90] sm:%s145]
                %191 = vst [vmem:[%s153 + $0x48] sm:%s145] %v190
                %v192 = vld [vmem:[%s152 + $0x94] sm:%s145]
                %193 = vst [vmem:[%s153 + $0x4c] sm:%s145] %v192
                %v194 = vld [vmem:[%s152 + $0x98] sm:%s145]
                %195 = vst [vmem:[%s153 + $0x50] sm:%s145] %v194
                %v196 = vld [vmem:[%s152 + $0x9c] sm:%s145]
                %197 = vst [vmem:[%s153 + $0x54] sm:%s145] %v196
                %v198 = vld [vmem:[%s152 + $0xa0] sm:%s145]
                %199 = vst [vmem:[%s153 + $0x58] sm:%s145] %v198
                %v200 = vld [vmem:[%s152 + $0xa4] sm:%s145]
                %201 = vst [vmem:[%s153 + $0x5c] sm:%s145] %v200
                %v202 = vld [vmem:[%s152 + $0xa8] sm:%s145]
                %203 = vst [vmem:[%s153 + $0x60] sm:%s145] %v202
                %v204 = vld [vmem:[%s152 + $0xac] sm:%s145]
                %205 = vst [vmem:[%s153 + $0x64] sm:%s145] %v204
                %v206 = vld [vmem:[%s152 + $0xb0] sm:%s145]
                %207 = vst [vmem:[%s153 + $0x68] sm:%s145] %v206
                %v208 = vld [vmem:[%s152 + $0xb4] sm:%s145]
                %209 = vst [vmem:[%s153 + $0x6c] sm:%s145] %v208
                %v210 = vld [vmem:[%s152 + $0xb8] sm:%s145]
                %211 = vst [vmem:[%s153 + $0x70] sm:%s145] %v210
                %v212 = vld [vmem:[%s152 + $0xbc] sm:%s145]
                %213 = vst [vmem:[%s153 + $0x74] sm:%s145] %v212
                %v214 = vld [vmem:[%s152 + $0xc0] sm:%s145]
                %215 = vst [vmem:[%s153 + $0x78] sm:%s145] %v214
                %v216 = vld [vmem:[%s152 + $0xc4] sm:%s145]
                %217 = vst [vmem:[%s153 + $0x7c] sm:%s145] %v216
                %v218 = vld [vmem:[%s152 + $0xc8] sm:%s145]
                %219 = vst [vmem:[%s153 + $0x80] sm:%s145] %v218
                %v220 = vld [vmem:[%s152 + $0xcc] sm:%s145]
                %221 = vst [vmem:[%s153 + $0x84] sm:%s145] %v220
                %v222 = vld [vmem:[%s152 + $0xd0] sm:%s145]
                %223 = vst [vmem:[%s153 + $0x88] sm:%s145] %v222
                %v224 = vld [vmem:[%s152 + $0xd4] sm:%s145]
                %225 = vst [vmem:[%s153 + $0x8c] sm:%s145] %v224
                %v226 = vld [vmem:[%s152 + $0x120] sm:%s145]
                %227 = vst [vmem:[%s153 + $0x90] sm:%s145] %v226
                %v228 = vld [vmem:[%s152 + $0x124] sm:%s145]
                %229 = vst [vmem:[%s153 + $0x94] sm:%s145] %v228
                %v230 = vld [vmem:[%s152 + $0x128] sm:%s145]
                %231 = vst [vmem:[%s153 + $0x98] sm:%s145] %v230
                %v232 = vld [vmem:[%s152 + $0x12c] sm:%s145]
                %233 = vst [vmem:[%s153 + $0x9c] sm:%s145] %v232
                %v234 = vld [vmem:[%s152 + $0x130] sm:%s145]
                %235 = vst [vmem:[%s153 + $0xa0] sm:%s145] %v234
                %v236 = vld [vmem:[%s152 + $0x134] sm:%s145]
                %237 = vst [vmem:[%s153 + $0xa4] sm:%s145] %v236
                %v238 = vld [vmem:[%s152 + $0x138] sm:%s145]
                %239 = vst [vmem:[%s153 + $0xa8] sm:%s145] %v238
                %v240 = vld [vmem:[%s152 + $0x13c] sm:%s145]
                %241 = vst [vmem:[%s153 + $0xac] sm:%s145] %v240
                %v242 = vld [vmem:[%s152 + $0x140] sm:%s145]
                %243 = vst [vmem:[%s153 + $0xb0] sm:%s145] %v242
                %v244 = vld [vmem:[%s152 + $0x144] sm:%s145]
                %245 = vst [vmem:[%s153 + $0xb4] sm:%s145] %v244
                %v246 = vld [vmem:[%s152 + $0x148] sm:%s145]
                %247 = vst [vmem:[%s153 + $0xb8] sm:%s145] %v246
                %v248 = vld [vmem:[%s152 + $0x14c] sm:%s145]
                %249 = vst [vmem:[%s153 + $0xbc] sm:%s145] %v248
                %v250 = vld [vmem:[%s152 + $0x150] sm:%s145]
                %251 = vst [vmem:[%s153 + $0xc0] sm:%s145] %v250
                %v252 = vld [vmem:[%s152 + $0x154] sm:%s145]
                %253 = vst [vmem:[%s153 + $0xc4] sm:%s145] %v252
                %v254 = vld [vmem:[%s152 + $0x158] sm:%s145]
                %255 = vst [vmem:[%s153 + $0xc8] sm:%s145] %v254
                %v256 = vld [vmem:[%s152 + $0x15c] sm:%s145]
                %257 = vst [vmem:[%s153 + $0xcc] sm:%s145] %v256
                %v258 = vld [vmem:[%s152 + $0x160] sm:%s145]
                %259 = vst [vmem:[%s153 + $0xd0] sm:%s145] %v258
                %v260 = vld [vmem:[%s152 + $0x164] sm:%s145]
                %261 = vst [vmem:[%s153 + $0xd4] sm:%s145] %v260
                %v262 = vld [vmem:[%s152 + $0x1b0] sm:%s145]
                %263 = vst [vmem:[%s153 + $0xd8] sm:%s145] %v262
                %v264 = vld [vmem:[%s152 + $0x1b4] sm:%s145]
                %265 = vst [vmem:[%s153 + $0xdc] sm:%s145] %v264
                %v266 = vld [vmem:[%s152 + $0x1b8] sm:%s145]
                %267 = vst [vmem:[%s153 + $0xe0] sm:%s145] %v266
                %v268 = vld [vmem:[%s152 + $0x1bc] sm:%s145]
                %269 = vst [vmem:[%s153 + $0xe4] sm:%s145] %v268
                %v270 = vld [vmem:[%s152 + $0x1c0] sm:%s145]
                %271 = vst [vmem:[%s153 + $0xe8] sm:%s145] %v270
                %v272 = vld [vmem:[%s152 + $0x1c4] sm:%s145]
                %273 = vst [vmem:[%s153 + $0xec] sm:%s145] %v272
                %v274 = vld [vmem:[%s152 + $0x1c8] sm:%s145]
                %275 = vst [vmem:[%s153 + $0xf0] sm:%s145] %v274
                %v276 = vld [vmem:[%s152 + $0x1cc] sm:%s145]
                %277 = vst [vmem:[%s153 + $0xf4] sm:%s145] %v276
                %v278 = vld [vmem:[%s152 + $0x1d0] sm:%s145]
                %279 = vst [vmem:[%s153 + $0xf8] sm:%s145] %v278
                %v280 = vld [vmem:[%s152 + $0x1d4] sm:%s145]
                %281 = vst [vmem:[%s153 + $0xfc] sm:%s145] %v280
                %v282 = vld [vmem:[%s152 + $0x1d8] sm:%s145]
                %283 = vst [vmem:[%s153 + $0x100] sm:%s145] %v282
                %v284 = vld [vmem:[%s152 + $0x1dc] sm:%s145]
                %285 = vst [vmem:[%s153 + $0x104] sm:%s145] %v284
                %v286 = vld [vmem:[%s152 + $0x1e0] sm:%s145]
                %287 = vst [vmem:[%s153 + $0x108] sm:%s145] %v286
                %v288 = vld [vmem:[%s152 + $0x1e4] sm:%s145]
                %289 = vst [vmem:[%s153 + $0x10c] sm:%s145] %v288
                %v290 = vld [vmem:[%s152 + $0x1e8] sm:%s145]
                %291 = vst [vmem:[%s153 + $0x110] sm:%s145] %v290
                %v292 = vld [vmem:[%s152 + $0x1ec] sm:%s145]
                %293 = vst [vmem:[%s153 + $0x114] sm:%s145] %v292
                %v294 = vld [vmem:[%s152 + $0x1f0] sm:%s145]
                %295 = vst [vmem:[%s153 + $0x118] sm:%s145] %v294
                %v296 = vld [vmem:[%s152 + $0x1f4] sm:%s145]
                %297 = vst [vmem:[%s153 + $0x11c] sm:%s145] %v296
              $region45: #{lenet_forward.3} parent=39 // loop_footer
                %s151 = sadd.s32 1, %s147
              $region46: #{lenet_forward.3} parent=39 // loop_footer_branch
                %146 = sbr.rel target = $region42
              $region47: #{lenet_forward.3} parent=39 // loop_exit
                _
            $region40: #{lenet_forward.3} parent=31 // pred_fallthru
              _
          $region32: #{lenet_forward.3} parent=27 // pred_fallthru
            _
          %462 = vnop
        $region28: #{lenet_forward.3} parent=23 // pred_fallthru
          _
      $region24: #{lenet_forward.3} parent=5 // pred_fallthru
        _
      %p463 = scmp.le.s32.totalorder 1, %s9
      %p464 = scmp.lt.s32.totalorder %s9, 3
      %p465 = pnand %p463, %p464
      %p466 = pneg %p465
      // Predicated region
      $region66: #{lenet_forward.3} parent=5 // pred_check
        _
      $region67: #{lenet_forward.3} parent=5 // pred_check_branch
        %468 = sbr.rel (%p465) target = $region69
      $region68: #{lenet_forward.3} parent=5 // pred_region
        %s469 = ssub.s32 %s9, 1
        %s470 = sand.u32 %s22, 1
        %s471 = sand.u32 %s22, 1
        %s472 = smul.addr %s471, 288
        %s473 = scalar_lea.vmem [#allocation2], %s472
        // Predicated region
        $region70: #{lenet_forward.3} parent=68 // pred_check
          %p474 = pneg %p35
        $region71: #{lenet_forward.3} parent=68 // pred_check_branch
          %476 = sbr.rel (%p474) target = $region73
        $region72: #{lenet_forward.3} parent=68 // pred_region
          _
        $region73: #{lenet_forward.3} parent=68 // pred_fallthru
          _
        %s477 = sand.u32 %s22, 1
        %s478 = sand.u32 %s22, 1
        %s479 = smul.addr %s478, 288
        %s480 = scalar_lea.vmem [#allocation2], %s479
        %p481 = pneg %p35
        %p482 = pneg %p32
        %p483 = pneg %p56
        %p484 = pneg %p53
        %p485 = pneg %p77
        %p486 = pneg %p74
        %p487 = pneg %p103
        %p488 = pneg %p100
        %s489 = smul.u32 18, %s14
        %p490 = scmp.lt.s32.totalorder %s489, 35
        %s491 = scalar_select %p490, %s489, 35
        %s492 = smul.addr %s491, 4
        %s493 = scalar_lea.vmem %s3, %s492
        %s494 = smul.u32 18, %s14
        %s495 = smul.u32 18, %s14
        %p496 = scmp.lt.s32.totalorder %s495, 35
        %s497 = scalar_select %p496, %s495, 35
        %s498 = smul.addr %s497, 4
        %s499 = scalar_lea.vmem %s3, %s498
        %s500 = smul.u32 18, %s14
        %v502 = vld [vmem:[%s473] sm:$0xf]
        %v503 = vld [vmem:[%s473 + $0x4] sm:$0xf]
        %v504 = vld [vmem:[%s473 + $0x8] sm:$0xf]
        %v505 = vld [vmem:[%s473 + $0xc] sm:$0xf]
        %v506 = vld [vmem:[%s473 + $0x10] sm:$0xf]
        %v507 = vld [vmem:[%s473 + $0x14] sm:$0xf]
        %v508 = vld [vmem:[%s473 + $0x18] sm:$0xf]
        %v509 = vld [vmem:[%s473 + $0x1c] sm:$0xf]
        %v510 = vld [vmem:[%s473 + $0x20] sm:$0xf]
        %v511 = vld [vmem:[%s473 + $0x24] sm:$0xf]
        %v512 = vld [vmem:[%s473 + $0x28] sm:$0xf]
        %v513 = vld [vmem:[%s473 + $0x2c] sm:$0xf]
        %v514 = vld [vmem:[%s473 + $0x30] sm:$0xf]
        %v515 = vld [vmem:[%s473 + $0x34] sm:$0xf]
        %v516 = vld [vmem:[%s473 + $0x38] sm:$0xf]
        %v517 = vld [vmem:[%s473 + $0x3c] sm:$0xf]
        %v518 = vld [vmem:[%s473 + $0x40] sm:$0xf]
        %v519 = vld [vmem:[%s473 + $0x44] sm:$0xf]
        %v520 = vld [vmem:[%s473 + $0x48] sm:$0xf]
        %v521 = vld [vmem:[%s473 + $0x4c] sm:$0xf]
        %v522 = vld [vmem:[%s473 + $0x50] sm:$0xf]
        %v523 = vld [vmem:[%s473 + $0x54] sm:$0xf]
        %v524 = vld [vmem:[%s473 + $0x58] sm:$0xf]
        %v525 = vld [vmem:[%s473 + $0x5c] sm:$0xf]
        %v526 = vld [vmem:[%s473 + $0x60] sm:$0xf]
        %v527 = vld [vmem:[%s473 + $0x64] sm:$0xf]
        %v528 = vld [vmem:[%s473 + $0x68] sm:$0xf]
        %v529 = vld [vmem:[%s473 + $0x6c] sm:$0xf]
        %v530 = vld [vmem:[%s473 + $0x70] sm:$0xf]
        %v531 = vld [vmem:[%s473 + $0x74] sm:$0xf]
        %v532 = vld [vmem:[%s473 + $0x78] sm:$0xf]
        %v533 = vld [vmem:[%s473 + $0x7c] sm:$0xf]
        %v534 = vld [vmem:[%s473 + $0x80] sm:$0xf]
        %v535 = vld [vmem:[%s473 + $0x84] sm:$0xf]
        %v536 = vld [vmem:[%s473 + $0x88] sm:$0xf]
        %v537 = vld [vmem:[%s473 + $0x8c] sm:$0xf]
        %v538 = vld [vmem:[%s473 + $0x90] sm:$0xf]
        %v539 = vld [vmem:[%s473 + $0x94] sm:$0xf]
        %v540 = vld [vmem:[%s473 + $0x98] sm:$0xf]
        %v541 = vld [vmem:[%s473 + $0x9c] sm:$0xf]
        %v542 = vld [vmem:[%s473 + $0xa0] sm:$0xf]
        %v543 = vld [vmem:[%s473 + $0xa4] sm:$0xf]
        %v544 = vld [vmem:[%s473 + $0xa8] sm:$0xf]
        %v545 = vld [vmem:[%s473 + $0xac] sm:$0xf]
        %v546 = vld [vmem:[%s473 + $0xb0] sm:$0xf]
        %v547 = vld [vmem:[%s473 + $0xb4] sm:$0xf]
        %v548 = vld [vmem:[%s473 + $0xb8] sm:$0xf]
        %v549 = vld [vmem:[%s473 + $0xbc] sm:$0xf]
        %v550 = vld [vmem:[%s473 + $0xc0] sm:$0xf]
        %v551 = vld [vmem:[%s473 + $0xc4] sm:$0xf]
        %v552 = vld [vmem:[%s473 + $0xc8] sm:$0xf]
        %v553 = vld [vmem:[%s473 + $0xcc] sm:$0xf]
        %v554 = vld [vmem:[%s473 + $0xd0] sm:$0xf]
        %v555 = vld [vmem:[%s473 + $0xd4] sm:$0xf]
        %v556 = vld [vmem:[%s473 + $0xd8] sm:$0xf]
        %v557 = vld [vmem:[%s473 + $0xdc] sm:$0xf]
        %v558 = vld [vmem:[%s473 + $0xe0] sm:$0xf]
        %v559 = vld [vmem:[%s473 + $0xe4] sm:$0xf]
        %v560 = vld [vmem:[%s473 + $0xe8] sm:$0xf]
        %v561 = vld [vmem:[%s473 + $0xec] sm:$0xf]
        %v562 = vld [vmem:[%s473 + $0xf0] sm:$0xf]
        %v563 = vld [vmem:[%s473 + $0xf4] sm:$0xf]
        %v564 = vld [vmem:[%s473 + $0xf8] sm:$0xf]
        %v565 = vld [vmem:[%s473 + $0xfc] sm:$0xf]
        %v566 = vld [vmem:[%s473 + $0x100] sm:$0xf]
        %v567 = vld [vmem:[%s473 + $0x104] sm:$0xf]
        %v568 = vld [vmem:[%s473 + $0x108] sm:$0xf]
        %v569 = vld [vmem:[%s473 + $0x10c] sm:$0xf]
        %v570 = vld [vmem:[%s473 + $0x110] sm:$0xf]
        %v571 = vld [vmem:[%s473 + $0x114] sm:$0xf]
        %v572 = vld [vmem:[%s473 + $0x118] sm:$0xf]
        %v573 = vld [vmem:[%s473 + $0x11c] sm:$0xf]
        %v574 = vld [vmem:[%s1] sm:$0xf]
        %v575 = vld [vmem:[%s1 + $0x4] sm:$0xf]
        %v576 = vld [vmem:[%s1 + $0x8] sm:$0xf]
        %v577 = vld [vmem:[%s1 + $0xc] sm:$0xf]
        %v650 = vunpack.c.l.b16 %v502
        %v651 = vunpack.c.l.b16 %v503
        %v652 = vunpack.c.l.b16 %v504
        %v653 = vunpack.c.l.b16 %v505
        %v654 = vunpack.c.l.b16 %v506
        %v655 = vunpack.c.l.b16 %v507
        %v656 = vunpack.c.l.b16 %v508
        %v657 = vunpack.c.l.b16 %v509
        %v658 = vunpack.c.l.b16 %v510
        %v659 = vunpack.c.l.b16 %v511
        %v660 = vunpack.c.l.b16 %v512
        %v661 = vunpack.c.l.b16 %v513
        %v662 = vunpack.c.l.b16 %v514
        %v663 = vunpack.c.l.b16 %v515
        %v664 = vunpack.c.l.b16 %v516
        %v665 = vunpack.c.l.b16 %v517
        %v666 = vunpack.c.l.b16 %v518
        %v667 = vunpack.c.l.b16 %v519
        %v668 = vunpack.c.l.b16 %v520
        %v669 = vunpack.c.l.b16 %v521
        %v670 = vunpack.c.l.b16 %v522
        %v671 = vunpack.c.l.b16 %v523
        %v672 = vunpack.c.l.b16 %v524
        %v673 = vunpack.c.l.b16 %v525
        %v674 = vunpack.c.l.b16 %v526
        %v675 = vunpack.c.l.b16 %v527
        %v676 = vunpack.c.l.b16 %v528
        %v677 = vunpack.c.l.b16 %v529
        %v678 = vunpack.c.l.b16 %v530
        %v679 = vunpack.c.l.b16 %v531
        %v680 = vunpack.c.l.b16 %v532
        %v681 = vunpack.c.l.b16 %v533
        %v682 = vunpack.c.l.b16 %v534
        %v683 = vunpack.c.l.b16 %v535
        %v684 = vunpack.c.l.b16 %v536
        %v685 = vunpack.c.l.b16 %v537
        %v686 = vunpack.c.l.b16 %v538
        %v687 = vunpack.c.l.b16 %v539
        %v688 = vunpack.c.l.b16 %v540
        %v689 = vunpack.c.l.b16 %v541
        %v690 = vunpack.c.l.b16 %v542
        %v691 = vunpack.c.l.b16 %v543
        %v692 = vunpack.c.l.b16 %v544
        %v693 = vunpack.c.l.b16 %v545
        %v694 = vunpack.c.l.b16 %v546
        %v695 = vunpack.c.l.b16 %v547
        %v696 = vunpack.c.l.b16 %v548
        %v697 = vunpack.c.l.b16 %v549
        %v698 = vunpack.c.l.b16 %v550
        %v699 = vunpack.c.l.b16 %v551
        %v700 = vunpack.c.l.b16 %v552
        %v701 = vunpack.c.l.b16 %v553
        %v702 = vunpack.c.l.b16 %v554
        %v703 = vunpack.c.l.b16 %v555
        %v704 = vunpack.c.l.b16 %v556
        %v705 = vunpack.c.l.b16 %v557
        %v706 = vunpack.c.l.b16 %v558
        %v707 = vunpack.c.l.b16 %v559
        %v708 = vunpack.c.l.b16 %v560
        %v709 = vunpack.c.l.b16 %v561
        %v710 = vunpack.c.l.b16 %v562
        %v711 = vunpack.c.l.b16 %v563
        %v712 = vunpack.c.l.b16 %v564
        %v713 = vunpack.c.l.b16 %v565
        %v714 = vunpack.c.l.b16 %v566
        %v715 = vunpack.c.l.b16 %v567
        %v716 = vunpack.c.l.b16 %v568
        %v717 = vunpack.c.l.b16 %v569
        %v718 = vunpack.c.l.b16 %v570
        %v719 = vunpack.c.l.b16 %v571
        %v720 = vunpack.c.l.b16 %v572
        %v721 = vunpack.c.l.b16 %v573
        %v722 = vpack.c.b16 %v651, %v650
        %v723 = vpack.c.b16 %v653, %v652
        %v724 = vpack.c.b16 %v655, %v654
        %v725 = vpack.c.b16 %v657, %v656
        %v726 = vpack.c.b16 %v659, %v658
        %v727 = vpack.c.b16 %v661, %v660
        %v728 = vpack.c.b16 %v663, %v662
        %v729 = vpack.c.b16 %v665, %v664
        %v730 = vpack.c.b16 %v667, %v666
        %v731 = vpack.c.b16 %v669, %v668
        %v732 = vpack.c.b16 %v671, %v670
        %v733 = vpack.c.b16 %v673, %v672
        %v734 = vpack.c.b16 %v675, %v674
        %v735 = vpack.c.b16 %v677, %v676
        %v736 = vpack.c.b16 %v679, %v678
        %v737 = vpack.c.b16 %v681, %v680
        %v738 = vpack.c.b16 %v683, %v682
        %v739 = vpack.c.b16 %v685, %v684
        %v740 = vpack.c.b16 %v687, %v686
        %v741 = vpack.c.b16 %v689, %v688
        %v742 = vpack.c.b16 %v691, %v690
        %v743 = vpack.c.b16 %v693, %v692
        %v744 = vpack.c.b16 %v695, %v694
        %v745 = vpack.c.b16 %v697, %v696
        %v746 = vpack.c.b16 %v699, %v698
        %v747 = vpack.c.b16 %v701, %v700
        %v748 = vpack.c.b16 %v703, %v702
        %v749 = vpack.c.b16 %v705, %v704
        %v750 = vpack.c.b16 %v707, %v706
        %v751 = vpack.c.b16 %v709, %v708
        %v752 = vpack.c.b16 %v711, %v710
        %v753 = vpack.c.b16 %v713, %v712
        %v754 = vpack.c.b16 %v715, %v714
        %v755 = vpack.c.b16 %v717, %v716
        %v756 = vpack.c.b16 %v719, %v718
        %v757 = vpack.c.b16 %v721, %v720
        %v762 = vunpack.c.l.b16 %v574
        %v763 = vunpack.c.l.b16 %v575
        %v764 = vunpack.c.l.b16 %v576
        %v765 = vunpack.c.l.b16 %v577
        %v766 = vpack.c.b16 %v763, %v762
        %v767 = vpack.c.b16 %v765, %v764
        %vm770 = vcmask 261120
        %v772 = vsel %vm770, %v722, 0
        %v775 = vsel %vm770, %v723, 0
        %v778 = vsel %vm770, %v724, 0
        %v781 = vsel %vm770, %v725, 0
        %v784 = vsel %vm770, %v726, 0
        %v787 = vsel %vm770, %v727, 0
        %v790 = vsel %vm770, %v728, 0
        %v793 = vsel %vm770, %v729, 0
        %v796 = vsel %vm770, %v730, 0
        %v799 = vsel %vm770, %v731, 0
        %v802 = vsel %vm770, %v732, 0
        %v805 = vsel %vm770, %v733, 0
        %v808 = vsel %vm770, %v734, 0
        %v811 = vsel %vm770, %v735, 0
        %v814 = vsel %vm770, %v736, 0
        %v817 = vsel %vm770, %v737, 0
        %v820 = vsel %vm770, %v738, 0
        %v823 = vsel %vm770, %v739, 0
        %v826 = vsel %vm770, %v740, 0
        %v829 = vsel %vm770, %v741, 0
        %v832 = vsel %vm770, %v742, 0
        %v835 = vsel %vm770, %v743, 0
        %v838 = vsel %vm770, %v744, 0
        %v841 = vsel %vm770, %v745, 0
        %v844 = vsel %vm770, %v746, 0
        %v847 = vsel %vm770, %v747, 0
        %v850 = vsel %vm770, %v748, 0
        %v853 = vsel %vm770, %v749, 0
        %v856 = vsel %vm770, %v750, 0
        %v859 = vsel %vm770, %v751, 0
        %v862 = vsel %vm770, %v752, 0
        %v865 = vsel %vm770, %v753, 0
        %v868 = vsel %vm770, %v754, 0
        %v871 = vsel %vm770, %v755, 0
        %v874 = vsel %vm770, %v756, 0
        %v877 = vsel %vm770, %v757, 0
        %879 = vmatprep.subr.bf16.mxu0 0
        %880 = vmatpush1.bf16.msra.mxu0 0
        %881 = vmatprep.subr.bf16.mxu0 0
        %882 = vmatpush1.bf16.msra.mxu0 0
        %883 = vmatprep.subr.bf16.mxu0 0
        %884 = vmatpush1.bf16.msra.mxu0 0
        %885 = vmatprep.subr.bf16.mxu0 0
        %886 = vmatpush1.bf16.msra.mxu0 0
        %887 = vmatprep.subr.bf16.mxu0 0
        %888 = vmatpush1.bf16.msra.mxu0 0
        %889 = vmatprep.subr.bf16.mxu0 0
        %890 = vmatpush1.bf16.msra.mxu0 0
        %891 = vmatprep.subr.bf16.mxu0 0
        %892 = vmatpush1.bf16.msra.mxu0 %v767
        %893 = vmatprep.subr.bf16.mxu0 0
        %894 = vmatpush1.bf16.msra.mxu0 %v766
        %895 = vmatprep.subr.bf16.mxu0 0
        %896 = vmatpush2.bf16.msra.mxu0 0
        %897 = vmatprep.subr.bf16.mxu0 0
        %898 = vmatpush2.bf16.msra.mxu0 0
        %899 = vmatprep.subr.bf16.mxu0 0
        %900 = vmatpush2.bf16.msra.mxu0 0
        %901 = vmatprep.subr.bf16.mxu0 0
        %902 = vmatpush2.bf16.msra.mxu0 0
        %903 = vmatprep.subr.bf16.mxu0 0
        %904 = vmatpush2.bf16.msra.mxu0 0
        %905 = vmatprep.subr.bf16.mxu0 0
        %906 = vmatpush2.bf16.msra.mxu0 0
        %907 = vmatprep.subr.bf16.mxu0 0
        %908 = vmatpush2.bf16.msra.mxu0 0
        %909 = vmatprep.subr.bf16.mxu0 0
        %910 = vmatpush2.bf16.msra.mxu0 0
        %911 = vmatprep.mubr.bf16.mxu0 0
        %912 = vmatmul.mubr.bf16.gmra.mxu0 %v772
        %v913 = vpop.f32.mrf.mxu0
        %v914 = vadd.f32 0.0, %v913
        %v915 = vpop.f32.mrf.mxu0
        %v916 = vpop.f32.mrf.mxu0
        %v917 = vadd.f32 0.0, %v916
        %v918 = vpop.f32.mrf.mxu0
        %919 = vmatprep.mubr.bf16.mxu0 0
        %920 = vmatmul.mubr.bf16.gmra.mxu0 %v775
        %v921 = vpop.f32.mrf.mxu0
        %v922 = vadd.f32 0.0, %v921
        %v923 = vpop.f32.mrf.mxu0
        %v924 = vpop.f32.mrf.mxu0
        %v925 = vadd.f32 0.0, %v924
        %v926 = vpop.f32.mrf.mxu0
        %927 = vmatprep.mubr.bf16.mxu0 0
        %928 = vmatmul.mubr.bf16.gmra.mxu0 %v778
        %v929 = vpop.f32.mrf.mxu0
        %v930 = vadd.f32 0.0, %v929
        %v931 = vpop.f32.mrf.mxu0
        %v932 = vpop.f32.mrf.mxu0
        %v933 = vadd.f32 0.0, %v932
        %v934 = vpop.f32.mrf.mxu0
        %935 = vmatprep.mubr.bf16.mxu0 0
        %936 = vmatmul.mubr.bf16.gmra.mxu0 %v781
        %v937 = vpop.f32.mrf.mxu0
        %v938 = vadd.f32 0.0, %v937
        %v939 = vpop.f32.mrf.mxu0
        %v940 = vpop.f32.mrf.mxu0
        %v941 = vadd.f32 0.0, %v940
        %v942 = vpop.f32.mrf.mxu0
        %943 = vmatprep.mubr.bf16.mxu0 0
        %944 = vmatmul.mubr.bf16.gmra.mxu0 %v784
        %v945 = vpop.f32.mrf.mxu0
        %v946 = vadd.f32 0.0, %v945
        %v947 = vpop.f32.mrf.mxu0
        %v948 = vpop.f32.mrf.mxu0
        %v949 = vadd.f32 0.0, %v948
        %v950 = vpop.f32.mrf.mxu0
        %951 = vmatprep.mubr.bf16.mxu0 0
        %952 = vmatmul.mubr.bf16.gmra.mxu0 %v787
        %v953 = vpop.f32.mrf.mxu0
        %v954 = vadd.f32 0.0, %v953
        %v955 = vpop.f32.mrf.mxu0
        %v956 = vpop.f32.mrf.mxu0
        %v957 = vadd.f32 0.0, %v956
        %v958 = vpop.f32.mrf.mxu0
        %959 = vmatprep.mubr.bf16.mxu0 0
        %960 = vmatmul.mubr.bf16.gmra.mxu0 %v790
        %v961 = vpop.f32.mrf.mxu0
        %v962 = vadd.f32 0.0, %v961
        %v963 = vpop.f32.mrf.mxu0
        %v964 = vpop.f32.mrf.mxu0
        %v965 = vadd.f32 0.0, %v964
        %v966 = vpop.f32.mrf.mxu0
        %967 = vmatprep.mubr.bf16.mxu0 0
        %968 = vmatmul.mubr.bf16.gmra.mxu0 %v793
        %v969 = vpop.f32.mrf.mxu0
        %v970 = vadd.f32 0.0, %v969
        %v971 = vpop.f32.mrf.mxu0
        %v972 = vpop.f32.mrf.mxu0
        %v973 = vadd.f32 0.0, %v972
        %v974 = vpop.f32.mrf.mxu0
        %975 = vmatprep.mubr.bf16.mxu0 0
        %976 = vmatmul.mubr.bf16.gmra.mxu0 %v796
        %v977 = vpop.f32.mrf.mxu0
        %v978 = vadd.f32 0.0, %v977
        %v979 = vpop.f32.mrf.mxu0
        %v980 = vpop.f32.mrf.mxu0
        %v981 = vadd.f32 0.0, %v980
        %v982 = vpop.f32.mrf.mxu0
        %983 = vmatprep.mubr.bf16.mxu0 0
        %984 = vmatmul.mubr.bf16.gmra.mxu0 %v799
        %v985 = vpop.f32.mrf.mxu0
        %v986 = vadd.f32 0.0, %v985
        %v987 = vpop.f32.mrf.mxu0
        %v988 = vpop.f32.mrf.mxu0
        %v989 = vadd.f32 0.0, %v988
        %v990 = vpop.f32.mrf.mxu0
        %991 = vmatprep.mubr.bf16.mxu0 0
        %992 = vmatmul.mubr.bf16.gmra.mxu0 %v802
        %v993 = vpop.f32.mrf.mxu0
        %v994 = vadd.f32 0.0, %v993
        %v995 = vpop.f32.mrf.mxu0
        %v996 = vpop.f32.mrf.mxu0
        %v997 = vadd.f32 0.0, %v996
        %v998 = vpop.f32.mrf.mxu0
        %999 = vmatprep.mubr.bf16.mxu0 0
        %1000 = vmatmul.mubr.bf16.gmra.mxu0 %v805
        %v1001 = vpop.f32.mrf.mxu0
        %v1002 = vadd.f32 0.0, %v1001
        %v1003 = vpop.f32.mrf.mxu0
        %v1004 = vpop.f32.mrf.mxu0
        %v1005 = vadd.f32 0.0, %v1004
        %v1006 = vpop.f32.mrf.mxu0
        %1007 = vmatprep.mubr.bf16.mxu0 0
        %1008 = vmatmul.mubr.bf16.gmra.mxu0 %v808
        %v1009 = vpop.f32.mrf.mxu0
        %v1010 = vadd.f32 0.0, %v1009
        %v1011 = vpop.f32.mrf.mxu0
        %v1012 = vpop.f32.mrf.mxu0
        %v1013 = vadd.f32 0.0, %v1012
        %v1014 = vpop.f32.mrf.mxu0
        %1015 = vmatprep.mubr.bf16.mxu0 0
        %1016 = vmatmul.mubr.bf16.gmra.mxu0 %v811
        %v1017 = vpop.f32.mrf.mxu0
        %v1018 = vadd.f32 0.0, %v1017
        %v1019 = vpop.f32.mrf.mxu0
        %v1020 = vpop.f32.mrf.mxu0
        %v1021 = vadd.f32 0.0, %v1020
        %v1022 = vpop.f32.mrf.mxu0
        %1023 = vmatprep.mubr.bf16.mxu0 0
        %1024 = vmatmul.mubr.bf16.gmra.mxu0 %v814
        %v1025 = vpop.f32.mrf.mxu0
        %v1026 = vadd.f32 0.0, %v1025
        %v1027 = vpop.f32.mrf.mxu0
        %v1028 = vpop.f32.mrf.mxu0
        %v1029 = vadd.f32 0.0, %v1028
        %v1030 = vpop.f32.mrf.mxu0
        %1031 = vmatprep.mubr.bf16.mxu0 0
        %1032 = vmatmul.mubr.bf16.gmra.mxu0 %v817
        %v1033 = vpop.f32.mrf.mxu0
        %v1034 = vadd.f32 0.0, %v1033
        %v1035 = vpop.f32.mrf.mxu0
        %v1036 = vpop.f32.mrf.mxu0
        %v1037 = vadd.f32 0.0, %v1036
        %v1038 = vpop.f32.mrf.mxu0
        %1039 = vmatprep.mubr.bf16.mxu0 0
        %1040 = vmatmul.mubr.bf16.gmra.mxu0 %v820
        %v1041 = vpop.f32.mrf.mxu0
        %v1042 = vadd.f32 0.0, %v1041
        %v1043 = vpop.f32.mrf.mxu0
        %v1044 = vpop.f32.mrf.mxu0
        %v1045 = vadd.f32 0.0, %v1044
        %v1046 = vpop.f32.mrf.mxu0
        %1047 = vmatprep.mubr.bf16.mxu0 0
        %1048 = vmatmul.mubr.bf16.gmra.mxu0 %v823
        %v1049 = vpop.f32.mrf.mxu0
        %v1050 = vadd.f32 0.0, %v1049
        %v1051 = vpop.f32.mrf.mxu0
        %v1052 = vpop.f32.mrf.mxu0
        %v1053 = vadd.f32 0.0, %v1052
        %v1054 = vpop.f32.mrf.mxu0
        %1055 = vmatprep.mubr.bf16.mxu0 0
        %1056 = vmatmul.mubr.bf16.gmra.mxu0 %v826
        %v1057 = vpop.f32.mrf.mxu0
        %v1058 = vadd.f32 0.0, %v1057
        %v1059 = vpop.f32.mrf.mxu0
        %v1060 = vpop.f32.mrf.mxu0
        %v1061 = vadd.f32 0.0, %v1060
        %v1062 = vpop.f32.mrf.mxu0
        %1063 = vmatprep.mubr.bf16.mxu0 0
        %1064 = vmatmul.mubr.bf16.gmra.mxu0 %v829
        %v1065 = vpop.f32.mrf.mxu0
        %v1066 = vadd.f32 0.0, %v1065
        %v1067 = vpop.f32.mrf.mxu0
        %v1068 = vpop.f32.mrf.mxu0
        %v1069 = vadd.f32 0.0, %v1068
        %v1070 = vpop.f32.mrf.mxu0
        %1071 = vmatprep.mubr.bf16.mxu0 0
        %1072 = vmatmul.mubr.bf16.gmra.mxu0 %v832
        %v1073 = vpop.f32.mrf.mxu0
        %v1074 = vadd.f32 0.0, %v1073
        %v1075 = vpop.f32.mrf.mxu0
        %v1076 = vpop.f32.mrf.mxu0
        %v1077 = vadd.f32 0.0, %v1076
        %v1078 = vpop.f32.mrf.mxu0
        %1079 = vmatprep.mubr.bf16.mxu0 0
        %1080 = vmatmul.mubr.bf16.gmra.mxu0 %v835
        %v1081 = vpop.f32.mrf.mxu0
        %v1082 = vadd.f32 0.0, %v1081
        %v1083 = vpop.f32.mrf.mxu0
        %v1084 = vpop.f32.mrf.mxu0
        %v1085 = vadd.f32 0.0, %v1084
        %v1086 = vpop.f32.mrf.mxu0
        %1087 = vmatprep.mubr.bf16.mxu0 0
        %1088 = vmatmul.mubr.bf16.gmra.mxu0 %v838
        %v1089 = vpop.f32.mrf.mxu0
        %v1090 = vadd.f32 0.0, %v1089
        %v1091 = vpop.f32.mrf.mxu0
        %v1092 = vpop.f32.mrf.mxu0
        %v1093 = vadd.f32 0.0, %v1092
        %v1094 = vpop.f32.mrf.mxu0
        %1095 = vmatprep.mubr.bf16.mxu0 0
        %1096 = vmatmul.mubr.bf16.gmra.mxu0 %v841
        %v1097 = vpop.f32.mrf.mxu0
        %v1098 = vadd.f32 0.0, %v1097
        %v1099 = vpop.f32.mrf.mxu0
        %v1100 = vpop.f32.mrf.mxu0
        %v1101 = vadd.f32 0.0, %v1100
        %v1102 = vpop.f32.mrf.mxu0
        %1103 = vmatprep.mubr.bf16.mxu0 0
        %1104 = vmatmul.mubr.bf16.gmra.mxu0 %v844
        %v1105 = vpop.f32.mrf.mxu0
        %v1106 = vadd.f32 0.0, %v1105
        %v1107 = vpop.f32.mrf.mxu0
        %v1108 = vpop.f32.mrf.mxu0
        %v1109 = vadd.f32 0.0, %v1108
        %v1110 = vpop.f32.mrf.mxu0
        %1111 = vmatprep.mubr.bf16.mxu0 0
        %1112 = vmatmul.mubr.bf16.gmra.mxu0 %v847
        %v1113 = vpop.f32.mrf.mxu0
        %v1114 = vadd.f32 0.0, %v1113
        %v1115 = vpop.f32.mrf.mxu0
        %v1116 = vpop.f32.mrf.mxu0
        %v1117 = vadd.f32 0.0, %v1116
        %v1118 = vpop.f32.mrf.mxu0
        %1119 = vmatprep.mubr.bf16.mxu0 0
        %1120 = vmatmul.mubr.bf16.gmra.mxu0 %v850
        %v1121 = vpop.f32.mrf.mxu0
        %v1122 = vadd.f32 0.0, %v1121
        %v1123 = vpop.f32.mrf.mxu0
        %v1124 = vpop.f32.mrf.mxu0
        %v1125 = vadd.f32 0.0, %v1124
        %v1126 = vpop.f32.mrf.mxu0
        %1127 = vmatprep.mubr.bf16.mxu0 0
        %1128 = vmatmul.mubr.bf16.gmra.mxu0 %v853
        %v1129 = vpop.f32.mrf.mxu0
        %v1130 = vadd.f32 0.0, %v1129
        %v1131 = vpop.f32.mrf.mxu0
        %v1132 = vpop.f32.mrf.mxu0
        %v1133 = vadd.f32 0.0, %v1132
        %v1134 = vpop.f32.mrf.mxu0
        %1135 = vmatprep.mubr.bf16.mxu0 0
        %1136 = vmatmul.mubr.bf16.gmra.mxu0 %v856
        %v1137 = vpop.f32.mrf.mxu0
        %v1138 = vadd.f32 0.0, %v1137
        %v1139 = vpop.f32.mrf.mxu0
        %v1140 = vpop.f32.mrf.mxu0
        %v1141 = vadd.f32 0.0, %v1140
        %v1142 = vpop.f32.mrf.mxu0
        %1143 = vmatprep.mubr.bf16.mxu0 0
        %1144 = vmatmul.mubr.bf16.gmra.mxu0 %v859
        %v1145 = vpop.f32.mrf.mxu0
        %v1146 = vadd.f32 0.0, %v1145
        %v1147 = vpop.f32.mrf.mxu0
        %v1148 = vpop.f32.mrf.mxu0
        %v1149 = vadd.f32 0.0, %v1148
        %v1150 = vpop.f32.mrf.mxu0
        %1151 = vmatprep.mubr.bf16.mxu0 0
        %1152 = vmatmul.mubr.bf16.gmra.mxu0 %v862
        %v1153 = vpop.f32.mrf.mxu0
        %v1154 = vadd.f32 0.0, %v1153
        %v1155 = vpop.f32.mrf.mxu0
        %v1156 = vpop.f32.mrf.mxu0
        %v1157 = vadd.f32 0.0, %v1156
        %v1158 = vpop.f32.mrf.mxu0
        %1159 = vmatprep.mubr.bf16.mxu0 0
        %1160 = vmatmul.mubr.bf16.gmra.mxu0 %v865
        %v1161 = vpop.f32.mrf.mxu0
        %v1162 = vadd.f32 0.0, %v1161
        %v1163 = vpop.f32.mrf.mxu0
        %v1164 = vpop.f32.mrf.mxu0
        %v1165 = vadd.f32 0.0, %v1164
        %v1166 = vpop.f32.mrf.mxu0
        %1167 = vmatprep.mubr.bf16.mxu0 0
        %1168 = vmatmul.mubr.bf16.gmra.mxu0 %v868
        %v1169 = vpop.f32.mrf.mxu0
        %v1170 = vadd.f32 0.0, %v1169
        %v1171 = vpop.f32.mrf.mxu0
        %v1172 = vpop.f32.mrf.mxu0
        %v1173 = vadd.f32 0.0, %v1172
        %v1174 = vpop.f32.mrf.mxu0
        %1175 = vmatprep.mubr.bf16.mxu0 0
        %1176 = vmatmul.mubr.bf16.gmra.mxu0 %v871
        %v1177 = vpop.f32.mrf.mxu0
        %v1178 = vadd.f32 0.0, %v1177
        %v1179 = vpop.f32.mrf.mxu0
        %v1180 = vpop.f32.mrf.mxu0
        %v1181 = vadd.f32 0.0, %v1180
        %v1182 = vpop.f32.mrf.mxu0
        %1183 = vmatprep.mubr.bf16.mxu0 0
        %1184 = vmatmul.mubr.bf16.gmra.mxu0 %v874
        %v1185 = vpop.f32.mrf.mxu0
        %v1186 = vadd.f32 0.0, %v1185
        %v1187 = vpop.f32.mrf.mxu0
        %v1188 = vpop.f32.mrf.mxu0
        %v1189 = vadd.f32 0.0, %v1188
        %v1190 = vpop.f32.mrf.mxu0
        %1191 = vmatprep.mubr.bf16.mxu0 0
        %1192 = vmatmul.mubr.bf16.gmra.mxu0 %v877
        %v1193 = vpop.f32.mrf.mxu0
        %v1194 = vadd.f32 0.0, %v1193
        %v1195 = vpop.f32.mrf.mxu0
        %v1196 = vpop.f32.mrf.mxu0
        %v1197 = vadd.f32 0.0, %v1196
        %v1198 = vpop.f32.mrf.mxu0
        %1199 = vdwg.mxu0
        %v1200 = vmax.f32 %v914, %v986
        %v1201 = vmax.f32 %v917, %v989
        %v1202 = vmax.f32 %v922, %v994
        %v1203 = vmax.f32 %v925, %v997
        %v1204 = vmax.f32 %v930, %v1002
        %v1205 = vmax.f32 %v933, %v1005
        %v1206 = vmax.f32 %v938, %v1010
        %v1207 = vmax.f32 %v941, %v1013
        %v1208 = vmax.f32 %v946, %v1018
        %v1209 = vmax.f32 %v949, %v1021
        %v1210 = vmax.f32 %v954, %v1026
        %v1211 = vmax.f32 %v957, %v1029
        %v1212 = vmax.f32 %v962, %v1034
        %v1213 = vmax.f32 %v965, %v1037
        %v1214 = vmax.f32 %v970, %v1042
        %v1215 = vmax.f32 %v973, %v1045
        %v1216 = vmax.f32 %v978, %v1050
        %v1217 = vmax.f32 %v981, %v1053
        %v1218 = vmax.f32 %v1058, %v1130
        %v1219 = vmax.f32 %v1061, %v1133
        %v1220 = vmax.f32 %v1066, %v1138
        %v1221 = vmax.f32 %v1069, %v1141
        %v1222 = vmax.f32 %v1074, %v1146
        %v1223 = vmax.f32 %v1077, %v1149
        %v1224 = vmax.f32 %v1082, %v1154
        %v1225 = vmax.f32 %v1085, %v1157
        %v1226 = vmax.f32 %v1090, %v1162
        %v1227 = vmax.f32 %v1093, %v1165
        %v1228 = vmax.f32 %v1098, %v1170
        %v1229 = vmax.f32 %v1101, %v1173
        %v1230 = vmax.f32 %v1106, %v1178
        %v1231 = vmax.f32 %v1109, %v1181
        %v1232 = vmax.f32 %v1114, %v1186
        %v1233 = vmax.f32 %v1117, %v1189
        %v1234 = vmax.f32 %v1122, %v1194
        %v1235 = vmax.f32 %v1125, %v1197
        %v1236 = vmax.f32 %v1200, %v1218
        %v1237 = vmax.f32 %v1201, %v1219
        %v1238 = vmax.f32 %v1202, %v1220
        %v1239 = vmax.f32 %v1203, %v1221
        %v1240 = vmax.f32 %v1204, %v1222
        %v1241 = vmax.f32 %v1205, %v1223
        %v1242 = vmax.f32 %v1206, %v1224
        %v1243 = vmax.f32 %v1207, %v1225
        %v1244 = vmax.f32 %v1208, %v1226
        %v1245 = vmax.f32 %v1209, %v1227
        %v1246 = vmax.f32 %v1210, %v1228
        %v1247 = vmax.f32 %v1211, %v1229
        %v1248 = vmax.f32 %v1212, %v1230
        %v1249 = vmax.f32 %v1213, %v1231
        %v1250 = vmax.f32 %v1214, %v1232
        %v1251 = vmax.f32 %v1215, %v1233
        %v1252 = vmax.f32 %v1216, %v1234
        %v1253 = vmax.f32 %v1217, %v1235
        %v1254 = vld [vmem:[%s2] sm:$0x1]
        %v1256 = vlaneseq
        %v1257 = vshrl.u32 %v1256, 7
        %v1258 = vsub.s32 0, %v1257
        %v1259 = vrot.slane %v1254, %v1258
        %v1261 = vadd.f32 %v1236, %v1259
        %v1262 = vadd.f32 %v1237, %v1259
        %v1263 = vadd.f32 %v1238, %v1259
        %v1264 = vadd.f32 %v1239, %v1259
        %v1265 = vadd.f32 %v1240, %v1259
        %v1266 = vadd.f32 %v1241, %v1259
        %v1267 = vadd.f32 %v1242, %v1259
        %v1268 = vadd.f32 %v1243, %v1259
        %v1269 = vadd.f32 %v1244, %v1259
        %v1270 = vadd.f32 %v1245, %v1259
        %v1271 = vadd.f32 %v1246, %v1259
        %v1272 = vadd.f32 %v1247, %v1259
        %v1273 = vadd.f32 %v1248, %v1259
        %v1274 = vadd.f32 %v1249, %v1259
        %v1275 = vadd.f32 %v1250, %v1259
        %v1276 = vadd.f32 %v1251, %v1259
        %v1277 = vadd.f32 %v1252, %v1259
        %v1278 = vadd.f32 %v1253, %v1259
        %v1279 = vmax.f32 %v1261, 0.0
        %v1280 = vmax.f32 %v1262, 0.0
        %v1281 = vmax.f32 %v1263, 0.0
        %v1282 = vmax.f32 %v1264, 0.0
        %v1283 = vmax.f32 %v1265, 0.0
        %v1284 = vmax.f32 %v1266, 0.0
        %v1285 = vmax.f32 %v1267, 0.0
        %v1286 = vmax.f32 %v1268, 0.0
        %v1287 = vmax.f32 %v1269, 0.0
        %v1288 = vmax.f32 %v1270, 0.0
        %v1289 = vmax.f32 %v1271, 0.0
        %v1290 = vmax.f32 %v1272, 0.0
        %v1291 = vmax.f32 %v1273, 0.0
        %v1292 = vmax.f32 %v1274, 0.0
        %v1293 = vmax.f32 %v1275, 0.0
        %v1294 = vmax.f32 %v1276, 0.0
        %v1295 = vmax.f32 %v1277, 0.0
        %v1296 = vmax.f32 %v1278, 0.0
        %v1297 = vpack.c.bf16 %v1280, %v1279
        %v1298 = vpack.c.bf16 %v1282, %v1281
        %v1299 = vpack.c.bf16 %v1284, %v1283
        %v1300 = vpack.c.bf16 %v1286, %v1285
        %v1301 = vpack.c.bf16 %v1288, %v1287
        %v1302 = vpack.c.bf16 %v1290, %v1289
        %v1303 = vpack.c.bf16 %v1292, %v1291
        %v1304 = vpack.c.bf16 %v1294, %v1293
        %v1305 = vpack.c.bf16 %v1296, %v1295
        %v1315 = vunpack.c.l.b16 %v1297
        %v1316 = vunpack.c.h.b16 %v1297
        %v1317 = vunpack.c.l.b16 %v1298
        %v1318 = vunpack.c.h.b16 %v1298
        %v1319 = vunpack.c.l.b16 %v1299
        %v1320 = vunpack.c.h.b16 %v1299
        %v1321 = vunpack.c.l.b16 %v1300
        %v1322 = vunpack.c.h.b16 %v1300
        %v1323 = vunpack.c.l.b16 %v1301
        %v1324 = vunpack.c.h.b16 %v1301
        %v1325 = vunpack.c.l.b16 %v1302
        %v1326 = vunpack.c.h.b16 %v1302
        %v1327 = vunpack.c.l.b16 %v1303
        %v1328 = vunpack.c.h.b16 %v1303
        %v1329 = vunpack.c.l.b16 %v1304
        %v1330 = vunpack.c.h.b16 %v1304
        %v1331 = vunpack.c.l.b16 %v1305
        %v1332 = vunpack.c.h.b16 %v1305
        %v1333 = vpack.c.b16 %v1315, %v1315
        %v1334 = vpack.c.b16 %v1316, %v1316
        %v1335 = vpack.c.b16 %v1317, %v1317
        %v1336 = vpack.c.b16 %v1318, %v1318
        %v1337 = vpack.c.b16 %v1319, %v1319
        %v1338 = vpack.c.b16 %v1320, %v1320
        %v1339 = vpack.c.b16 %v1321, %v1321
        %v1340 = vpack.c.b16 %v1322, %v1322
        %v1341 = vpack.c.b16 %v1323, %v1323
        %v1342 = vpack.c.b16 %v1324, %v1324
        %v1343 = vpack.c.b16 %v1325, %v1325
        %v1344 = vpack.c.b16 %v1326, %v1326
        %v1345 = vpack.c.b16 %v1327, %v1327
        %v1346 = vpack.c.b16 %v1328, %v1328
        %v1347 = vpack.c.b16 %v1329, %v1329
        %v1348 = vpack.c.b16 %v1330, %v1330
        %v1349 = vpack.c.b16 %v1331, %v1331
        %v1350 = vpack.c.b16 %v1332, %v1332
        %vm1369 = vcmask 60416
        %1370 = vst.msk [vmem:[%s499] sm:$0xf] %vm1369, %v1333
        %1371 = vst.msk [vmem:[%s499 + $0x4] sm:$0xf] %vm1369, %v1334
        %1372 = vst.msk [vmem:[%s499 + $0x8] sm:$0xf] %vm1369, %v1335
        %1373 = vst.msk [vmem:[%s499 + $0xc] sm:$0xf] %vm1369, %v1336
        %1374 = vst.msk [vmem:[%s499 + $0x10] sm:$0xf] %vm1369, %v1337
        %1375 = vst.msk [vmem:[%s499 + $0x14] sm:$0xf] %vm1369, %v1338
        %1376 = vst.msk [vmem:[%s499 + $0x18] sm:$0xf] %vm1369, %v1339
        %1377 = vst.msk [vmem:[%s499 + $0x1c] sm:$0xf] %vm1369, %v1340
        %1378 = vst.msk [vmem:[%s499 + $0x20] sm:$0xf] %vm1369, %v1341
        %1379 = vst.msk [vmem:[%s499 + $0x24] sm:$0xf] %vm1369, %v1342
        %1380 = vst.msk [vmem:[%s499 + $0x28] sm:$0xf] %vm1369, %v1343
        %1381 = vst.msk [vmem:[%s499 + $0x2c] sm:$0xf] %vm1369, %v1344
        %1382 = vst.msk [vmem:[%s499 + $0x30] sm:$0xf] %vm1369, %v1345
        %1383 = vst.msk [vmem:[%s499 + $0x34] sm:$0xf] %vm1369, %v1346
        %1384 = vst.msk [vmem:[%s499 + $0x38] sm:$0xf] %vm1369, %v1347
        %1385 = vst.msk [vmem:[%s499 + $0x3c] sm:$0xf] %vm1369, %v1348
        %1386 = vst.msk [vmem:[%s499 + $0x40] sm:$0xf] %vm1369, %v1349
        %1387 = vst.msk [vmem:[%s499 + $0x44] sm:$0xf] %vm1369, %v1350
        %s1388 = smul.u32 18, %s14
        %p1389 = scmp.lt.s32.totalorder %s1388, 35
        %s1390 = scalar_select %p1389, %s1388, 35
        %s1391 = smul.addr %s1390, 4
        %s1392 = scalar_lea.vmem %s3, %s1391
        // Predicated region
        $region74: #{lenet_forward.3} parent=68 // pred_check
          %p1393 = pneg %p100
        $region75: #{lenet_forward.3} parent=68 // pred_check_branch
          %1395 = sbr.rel (%p1393) target = $region77
        $region76: #{lenet_forward.3} parent=68 // pred_region
          %s1396 = smul.u32 18, %s14
        $region77: #{lenet_forward.3} parent=68 // pred_fallthru
          _
      $region69: #{lenet_forward.3} parent=5 // pred_fallthru
        _
      %p1397 = scmp.le.s32.totalorder 2, %s9
      // Predicated region
      $region78: #{lenet_forward.3} parent=5 // pred_check
        %p1398 = pneg %p1397
      $region79: #{lenet_forward.3} parent=5 // pred_check_branch
        %1400 = sbr.rel (%p1398) target = $region81
      $region80: #{lenet_forward.3} parent=5 // pred_region
        %s1401 = ssub.s32 %s9, 2
        // Predicated region
        $region82: #{lenet_forward.3} parent=80 // pred_check
          %p1402 = pneg %p106
        $region83: #{lenet_forward.3} parent=80 // pred_check_branch
          %1404 = sbr.rel (%p1402) target = $region85
        $region84: #{lenet_forward.3} parent=80 // pred_region
          %s1405 = smul.u32 18, %s15
          %p1406 = scmp.lt.s32.totalorder %s1405, 35
          %s1407 = scalar_select %p1406, %s1405, 35
          %s1408 = smul.addr %s1407, 4
          %s1409 = scalar_lea.vmem %s3, %s1408
        $region85: #{lenet_forward.3} parent=80 // pred_fallthru
          _
      $region81: #{lenet_forward.3} parent=5 // pred_fallthru
        _
    $region6: #{lenet_forward.3} parent=1 // loop_footer
      %s13 = sadd.s32 1, %s9
    $region7: #{lenet_forward.3} parent=1 // loop_footer_branch
      %8 = sbr.rel target = $region3
    $region8: #{lenet_forward.3} parent=1 // loop_exit
      _

// kernel: lenet_forward.4
$region0: #{lenet_forward.4}
  #allocation0 [shape = 'u32[]', space=smem, size = 0x4, offset = 0x4, fixed_abs, tag = 'smem constant byte address 0x4 - core index']
  #allocation1 [shape = 'u32[144,128]{1,0:T(1,128)}', space=vmem, size = 0x12000, scoped, tag = 'internal scratch']
  %s0 = inlined_call_operand.vmem [shape: bf16[4,32,160], index: 0, kind: input, shape index: {}]
  %s1 = inlined_call_operand.vmem [shape: bf16[160,16], index: 1, kind: input, shape index: {}]
  %s2 = inlined_call_operand.vmem [shape: f32[1,16], index: 2, kind: input, shape index: {}]
  %s3 = inlined_call_operand.vmem [shape: bf16[32,16], index: 3, kind: output, shape index: {}]
  %s4 = sld [smem:[#allocation0]]
  $region22: #{lenet_forward.4} parent=0
    _
  %s6 = ssub.s32 1, %s4
  %s7 = scalar_select 0, %s6, %s4
  // Predicated region
  $region2: #{lenet_forward.4} parent=0 // pred_check
    _
  $region3: #{lenet_forward.4} parent=0 // pred_check_branch
    %9 = sbr.rel (0) target = $region5
  $region4: #{lenet_forward.4} parent=0 // pred_region
    _
  $region5: #{lenet_forward.4} parent=0 // pred_fallthru
    _
  // Predicated region
  $region6: #{lenet_forward.4} parent=0 // pred_check
    _
  $region7: #{lenet_forward.4} parent=0 // pred_check_branch
    %11 = sbr.rel (0) target = $region9
  $region8: #{lenet_forward.4} parent=0 // pred_region
    _
  $region9: #{lenet_forward.4} parent=0 // pred_fallthru
    _
  // Predicated region
  $region10: #{lenet_forward.4} parent=0 // pred_check
    _
  $region11: #{lenet_forward.4} parent=0 // pred_check_branch
    %13 = sbr.rel (0) target = $region13
  $region12: #{lenet_forward.4} parent=0 // pred_region
    _
  $region13: #{lenet_forward.4} parent=0 // pred_fallthru
    _
  %v15 = vld [vmem:[%s0] sm:$0xff]
  %v16 = vld [vmem:[%s0 + $0x8] sm:$0xff]
  %v17 = vld [vmem:[%s0 + $0x10] sm:$0xff]
  %v18 = vld [vmem:[%s0 + $0x18] sm:$0xff]
  %v19 = vld [vmem:[%s0 + $0x20] sm:$0xff]
  %v20 = vld [vmem:[%s0 + $0x28] sm:$0xff]
  %v21 = vld [vmem:[%s0 + $0x30] sm:$0xff]
  %v22 = vld [vmem:[%s0 + $0x38] sm:$0xff]
  %v23 = vld [vmem:[%s0 + $0x40] sm:$0xff]
  %v24 = vld [vmem:[%s0 + $0x48] sm:$0xff]
  %v25 = vld [vmem:[%s0 + $0x50] sm:$0xff]
  %v26 = vld [vmem:[%s0 + $0x58] sm:$0xff]
  %v27 = vld [vmem:[%s0 + $0x60] sm:$0xff]
  %v28 = vld [vmem:[%s0 + $0x68] sm:$0xff]
  %v29 = vld [vmem:[%s0 + $0x70] sm:$0xff]
  %v30 = vld [vmem:[%s0 + $0x78] sm:$0xff]
  %v31 = vld [vmem:[%s1] sm:$0xf]
  %v32 = vld [vmem:[%s1 + $0x4] sm:$0xf]
  %v33 = vld [vmem:[%s1 + $0x8] sm:$0xf]
  %v34 = vld [vmem:[%s1 + $0xc] sm:$0xf]
  %v35 = vld [vmem:[%s1 + $0x10] sm:$0xf]
  %v36 = vld [vmem:[%s1 + $0x14] sm:$0xf]
  %v37 = vld [vmem:[%s1 + $0x18] sm:$0xf]
  %v38 = vld [vmem:[%s1 + $0x1c] sm:$0xf]
  %v39 = vld [vmem:[%s1 + $0x20] sm:$0xf]
  %v40 = vld [vmem:[%s1 + $0x24] sm:$0xf]
  %v41 = vld [vmem:[%s1 + $0x28] sm:$0xf]
  %v42 = vld [vmem:[%s1 + $0x2c] sm:$0xf]
  %v43 = vld [vmem:[%s1 + $0x30] sm:$0xf]
  %v44 = vld [vmem:[%s1 + $0x34] sm:$0xf]
  %v45 = vld [vmem:[%s1 + $0x38] sm:$0xf]
  %v46 = vld [vmem:[%s1 + $0x3c] sm:$0xf]
  %v47 = vld [vmem:[%s1 + $0x40] sm:$0xf]
  %v48 = vld [vmem:[%s1 + $0x44] sm:$0xf]
  %v49 = vld [vmem:[%s1 + $0x48] sm:$0xf]
  %v50 = vld [vmem:[%s1 + $0x4c] sm:$0xf]
  %v67 = vunpack.c.l.b16 %v15
  %v68 = vunpack.c.h.b16 %v15
  %v69 = vunpack.c.l.b16 %v16
  %v70 = vunpack.c.h.b16 %v16
  %v71 = vunpack.c.l.b16 %v17
  %v72 = vunpack.c.h.b16 %v17
  %v73 = vunpack.c.l.b16 %v18
  %v74 = vunpack.c.h.b16 %v18
  %v75 = vunpack.c.l.b16 %v19
  %v76 = vunpack.c.h.b16 %v19
  %v77 = vunpack.c.l.b16 %v20
  %v78 = vunpack.c.h.b16 %v20
  %v79 = vunpack.c.l.b16 %v21
  %v80 = vunpack.c.h.b16 %v21
  %v81 = vunpack.c.l.b16 %v22
  %v82 = vunpack.c.h.b16 %v22
  %v83 = vunpack.c.l.b16 %v23
  %v84 = vunpack.c.h.b16 %v23
  %v85 = vunpack.c.l.b16 %v24
  %v86 = vunpack.c.h.b16 %v24
  %v87 = vunpack.c.l.b16 %v25
  %v88 = vunpack.c.h.b16 %v25
  %v89 = vunpack.c.l.b16 %v26
  %v90 = vunpack.c.h.b16 %v26
  %v91 = vunpack.c.l.b16 %v27
  %v92 = vunpack.c.h.b16 %v27
  %v93 = vunpack.c.l.b16 %v28
  %v94 = vunpack.c.h.b16 %v28
  %v95 = vunpack.c.l.b16 %v29
  %v96 = vunpack.c.h.b16 %v29
  %v97 = vunpack.c.l.b16 %v30
  %v98 = vunpack.c.h.b16 %v30
  %v99 = vpack.c.b16 %v69, %v67
  %v100 = vpack.c.b16 %v70, %v68
  %v101 = vpack.c.b16 %v73, %v71
  %v102 = vpack.c.b16 %v74, %v72
  %v103 = vpack.c.b16 %v77, %v75
  %v104 = vpack.c.b16 %v78, %v76
  %v105 = vpack.c.b16 %v81, %v79
  %v106 = vpack.c.b16 %v82, %v80
  %v107 = vpack.c.b16 %v85, %v83
  %v108 = vpack.c.b16 %v86, %v84
  %v109 = vpack.c.b16 %v89, %v87
  %v110 = vpack.c.b16 %v90, %v88
  %v111 = vpack.c.b16 %v93, %v91
  %v112 = vpack.c.b16 %v94, %v92
  %v113 = vpack.c.b16 %v97, %v95
  %v114 = vpack.c.b16 %v98, %v96
  %v143 = vunpack.c.l.b16 %v31
  %v144 = vunpack.c.l.b16 %v32
  %v145 = vunpack.c.l.b16 %v33
  %v146 = vunpack.c.l.b16 %v34
  %v147 = vunpack.c.l.b16 %v35
  %v148 = vunpack.c.l.b16 %v36
  %v149 = vunpack.c.l.b16 %v37
  %v150 = vunpack.c.l.b16 %v38
  %v151 = vunpack.c.l.b16 %v39
  %v152 = vunpack.c.l.b16 %v40
  %v153 = vunpack.c.l.b16 %v41
  %v154 = vunpack.c.l.b16 %v42
  %v155 = vunpack.c.l.b16 %v43
  %v156 = vunpack.c.l.b16 %v44
  %v157 = vunpack.c.l.b16 %v45
  %v158 = vunpack.c.l.b16 %v46
  %v159 = vunpack.c.l.b16 %v47
  %v160 = vunpack.c.l.b16 %v48
  %v161 = vunpack.c.l.b16 %v49
  %v162 = vunpack.c.l.b16 %v50
  %v163 = vpack.c.b16 %v144, %v143
  %v164 = vpack.c.b16 %v146, %v145
  %v165 = vpack.c.b16 %v148, %v147
  %v166 = vpack.c.b16 %v150, %v149
  %v167 = vpack.c.b16 %v152, %v151
  %v168 = vpack.c.b16 %v154, %v153
  %v169 = vpack.c.b16 %v156, %v155
  %v170 = vpack.c.b16 %v158, %v157
  %v171 = vpack.c.b16 %v160, %v159
  %v172 = vpack.c.b16 %v162, %v161
  %vm183 = vcmask 261120
  %v185 = vsel %vm183, %v100, 0
  %v188 = vsel %vm183, %v102, 0
  %v191 = vsel %vm183, %v104, 0
  %v194 = vsel %vm183, %v106, 0
  %v197 = vsel %vm183, %v108, 0
  %v200 = vsel %vm183, %v110, 0
  %v203 = vsel %vm183, %v112, 0
  %v206 = vsel %vm183, %v114, 0
  %208 = vmatprep.subr.bf16.mxu0 0
  %209 = vmatpush1.bf16.msra.mxu0 %v170
  %210 = vmatprep.subr.bf16.mxu0 0
  %211 = vmatpush1.bf16.msra.mxu0 %v169
  %212 = vmatprep.subr.bf16.mxu0 0
  %213 = vmatpush1.bf16.msra.mxu0 %v168
  %214 = vmatprep.subr.bf16.mxu0 0
  %215 = vmatpush1.bf16.msra.mxu0 %v167
  %216 = vmatprep.subr.bf16.mxu0 0
  %217 = vmatpush1.bf16.msra.mxu0 %v166
  %218 = vmatprep.subr.bf16.mxu0 0
  %219 = vmatpush1.bf16.msra.mxu0 %v165
  %220 = vmatprep.subr.bf16.mxu0 0
  %221 = vmatpush1.bf16.msra.mxu0 %v164
  %222 = vmatprep.subr.bf16.mxu0 0
  %223 = vmatpush1.bf16.msra.mxu0 %v163
  %224 = vmatprep.subr.bf16.mxu0 0
  %225 = vmatpush2.bf16.msra.mxu0 0
  %226 = vmatprep.subr.bf16.mxu0 0
  %227 = vmatpush2.bf16.msra.mxu0 0
  %228 = vmatprep.subr.bf16.mxu0 0
  %229 = vmatpush2.bf16.msra.mxu0 0
  %230 = vmatprep.subr.bf16.mxu0 0
  %231 = vmatpush2.bf16.msra.mxu0 0
  %232 = vmatprep.subr.bf16.mxu0 0
  %233 = vmatpush2.bf16.msra.mxu0 0
  %234 = vmatprep.subr.bf16.mxu0 0
  %235 = vmatpush2.bf16.msra.mxu0 0
  %236 = vmatprep.subr.bf16.mxu0 0
  %237 = vmatpush2.bf16.msra.mxu0 %v172
  %238 = vmatprep.subr.bf16.mxu0 0
  %239 = vmatpush2.bf16.msra.mxu0 %v171
  %240 = vmatprep.mubr.bf16.mxu0 %v185
  %241 = vmatmul.mubr.bf16.gmra.mxu0 %v99
  %v242 = vpop.f32.mrf.mxu0
  %v243 = vadd.f32 0.0, %v242
  %v244 = vpop.f32.mrf.mxu0
  %v245 = vpop.f32.mrf.mxu0
  %v246 = vadd.f32 0.0, %v245
  %v247 = vpop.f32.mrf.mxu0
  %248 = vmatprep.mubr.bf16.mxu0 %v188
  %249 = vmatmul.mubr.bf16.gmra.mxu0 %v101
  %v250 = vpop.f32.mrf.mxu0
  %v251 = vadd.f32 0.0, %v250
  %v252 = vpop.f32.mrf.mxu0
  %v253 = vpop.f32.mrf.mxu0
  %v254 = vadd.f32 0.0, %v253
  %v255 = vpop.f32.mrf.mxu0
  %256 = vmatprep.mubr.bf16.mxu0 %v191
  %257 = vmatmul.mubr.bf16.gmra.mxu0 %v103
  %v258 = vpop.f32.mrf.mxu0
  %v259 = vadd.f32 0.0, %v258
  %v260 = vpop.f32.mrf.mxu0
  %v261 = vpop.f32.mrf.mxu0
  %v262 = vadd.f32 0.0, %v261
  %v263 = vpop.f32.mrf.mxu0
  %264 = vmatprep.mubr.bf16.mxu0 %v194
  %265 = vmatmul.mubr.bf16.gmra.mxu0 %v105
  %v266 = vpop.f32.mrf.mxu0
  %v267 = vadd.f32 0.0, %v266
  %v268 = vpop.f32.mrf.mxu0
  %v269 = vpop.f32.mrf.mxu0
  %v270 = vadd.f32 0.0, %v269
  %v271 = vpop.f32.mrf.mxu0
  %272 = vmatprep.mubr.bf16.mxu0 %v197
  %273 = vmatmul.mubr.bf16.gmra.mxu0 %v107
  %v274 = vpop.f32.mrf.mxu0
  %v275 = vadd.f32 0.0, %v274
  %v276 = vpop.f32.mrf.mxu0
  %v277 = vpop.f32.mrf.mxu0
  %v278 = vadd.f32 0.0, %v277
  %v279 = vpop.f32.mrf.mxu0
  %280 = vmatprep.mubr.bf16.mxu0 %v200
  %281 = vmatmul.mubr.bf16.gmra.mxu0 %v109
  %v282 = vpop.f32.mrf.mxu0
  %v283 = vadd.f32 0.0, %v282
  %v284 = vpop.f32.mrf.mxu0
  %v285 = vpop.f32.mrf.mxu0
  %v286 = vadd.f32 0.0, %v285
  %v287 = vpop.f32.mrf.mxu0
  %288 = vmatprep.mubr.bf16.mxu0 %v203
  %289 = vmatmul.mubr.bf16.gmra.mxu0 %v111
  %v290 = vpop.f32.mrf.mxu0
  %v291 = vadd.f32 0.0, %v290
  %v292 = vpop.f32.mrf.mxu0
  %v293 = vpop.f32.mrf.mxu0
  %v294 = vadd.f32 0.0, %v293
  %v295 = vpop.f32.mrf.mxu0
  %296 = vmatprep.mubr.bf16.mxu0 %v206
  %297 = vmatmul.mubr.bf16.gmra.mxu0 %v113
  %v298 = vpop.f32.mrf.mxu0
  %v299 = vadd.f32 0.0, %v298
  %v300 = vpop.f32.mrf.mxu0
  %v301 = vpop.f32.mrf.mxu0
  %v302 = vadd.f32 0.0, %v301
  %v303 = vpop.f32.mrf.mxu0
  %304 = vdwg.mxu0
  %v305 = vmax.f32 %v243, %v259
  %v306 = vmax.f32 %v246, %v262
  %v307 = vmax.f32 %v251, %v267
  %v308 = vmax.f32 %v254, %v270
  %v309 = vmax.f32 %v275, %v291
  %v310 = vmax.f32 %v278, %v294
  %v311 = vmax.f32 %v283, %v299
  %v312 = vmax.f32 %v286, %v302
  %v313 = vmax.f32 %v305, %v309
  %v314 = vmax.f32 %v306, %v310
  %v315 = vmax.f32 %v307, %v311
  %v316 = vmax.f32 %v308, %v312
  %v317 = vld [vmem:[%s2] sm:$0x1]
  %v319 = vlaneseq
  %v320 = vshrl.u32 %v319, 7
  %v321 = vsub.s32 0, %v320
  %v322 = vrot.slane %v317, %v321
  %v324 = vadd.f32 %v313, %v322
  %v325 = vadd.f32 %v314, %v322
  %v326 = vadd.f32 %v315, %v322
  %v327 = vadd.f32 %v316, %v322
  %v328 = vmax.f32 %v324, 0.0
  %v329 = vmax.f32 %v325, 0.0
  %v330 = vmax.f32 %v326, 0.0
  %v331 = vmax.f32 %v327, 0.0
  %v332 = vpack.c.bf16 %v329, %v328
  %v333 = vpack.c.bf16 %v331, %v330
  %v336 = vunpack.c.l.b16 %v332
  %v337 = vunpack.c.h.b16 %v332
  %v338 = vunpack.c.l.b16 %v333
  %v339 = vunpack.c.h.b16 %v333
  %v340 = vpack.c.b16 %v336, %v336
  %v341 = vpack.c.b16 %v337, %v337
  %v342 = vpack.c.b16 %v338, %v338
  %v343 = vpack.c.b16 %v339, %v339
  %vm348 = vcmask 125952
  %349 = vst.msk [vmem:[%s3] sm:$0xf] %vm348, %v340
  %350 = vst.msk [vmem:[%s3 + $0x4] sm:$0xf] %vm348, %v341
  %351 = vst.msk [vmem:[%s3 + $0x8] sm:$0xf] %vm348, %v342
  %352 = vst.msk [vmem:[%s3 + $0xc] sm:$0xf] %vm348, %v343
  // Predicated region
  $region14: #{lenet_forward.4} parent=0 // pred_check
    _
  $region15: #{lenet_forward.4} parent=0 // pred_check_branch
    %354 = sbr.rel (0) target = $region17
  $region16: #{lenet_forward.4} parent=0 // pred_region
    _
  $region17: #{lenet_forward.4} parent=0 // pred_fallthru
    _
  // Predicated region
  $region18: #{lenet_forward.4} parent=0 // pred_check
    _
  $region19: #{lenet_forward.4} parent=0 // pred_check_branch
    %356 = sbr.rel (0) target = $region21
  $region20: #{lenet_forward.4} parent=0 // pred_region
    _
  $region21: #{lenet_forward.4} parent=0 // pred_fallthru
    _

// kernel: lenet_forward.5
$region0: #{lenet_forward.5}
  #allocation0 [shape = 'u32[]', space=smem, size = 0x4, offset = 0x4, fixed_abs, tag = 'smem constant byte address 0x4 - core index']
  #allocation1 [shape = 'u32[144,128]{1,0:T(1,128)}', space=vmem, size = 0x12000, scoped, tag = 'internal scratch']
  %s0 = inlined_call_operand.vmem [shape: bf16[2,256], index: 0, kind: input, shape index: {}]
  %s1 = inlined_call_operand.vmem [shape: bf16[256,128], index: 1, kind: input, shape index: {}]
  %s2 = inlined_call_operand.vmem [shape: f32[1,128], index: 2, kind: input, shape index: {}]
  %s3 = inlined_call_operand.vmem [shape: bf16[128,128], index: 3, kind: input, shape index: {}]
  %s4 = inlined_call_operand.vmem [shape: f32[1,128], index: 4, kind: input, shape index: {}]
  %s5 = inlined_call_operand.vmem [shape: bf16[128,10], index: 5, kind: input, shape index: {}]
  %s6 = inlined_call_operand.vmem [shape: f32[1,10], index: 6, kind: input, shape index: {}]
  %s7 = inlined_call_operand.hbm [shape: f32[2,10], index: 7, kind: output, shape index: {}]
  %s8 = sld [smem:[#allocation0]]
  $region38: #{lenet_forward.5} parent=0
    _
  %s10 = ssub.s32 1, %s8
  %s11 = scalar_select 0, %s10, %s8
  $region1: #{lenet_forward.5} parent=0
    #allocation2 [shape = 'u8[1024]{0}', space=vmem, size = 0x400, scoped, tag = 'output window, operand 0, single buffered']
    #allocation3 [shape = 's32[1]{0}', space=sflag, size = 0x4, scoped, tag = 'scoped memory for lenet_forward.5']
    %12 = vsyncpa [#allocation3], 0
    // Predicated region
    $region2: #{lenet_forward.5} parent=1 // pred_check
      _
    $region3: #{lenet_forward.5} parent=1 // pred_check_branch
      %14 = sbr.rel (0) target = $region5
    $region4: #{lenet_forward.5} parent=1 // pred_region
      _
    $region5: #{lenet_forward.5} parent=1 // pred_fallthru
      _
    // Predicated region
    $region6: #{lenet_forward.5} parent=1 // pred_check
      _
    $region7: #{lenet_forward.5} parent=1 // pred_check_branch
      %16 = sbr.rel (0) target = $region9
    $region8: #{lenet_forward.5} parent=1 // pred_region
      _
    $region9: #{lenet_forward.5} parent=1 // pred_fallthru
      _
    // Predicated region
    $region10: #{lenet_forward.5} parent=1 // pred_check
      _
    $region11: #{lenet_forward.5} parent=1 // pred_check_branch
      %18 = sbr.rel (0) target = $region13
    $region12: #{lenet_forward.5} parent=1 // pred_region
      _
    $region13: #{lenet_forward.5} parent=1 // pred_fallthru
      _
    // Predicated region
    $region14: #{lenet_forward.5} parent=1 // pred_check
      _
    $region15: #{lenet_forward.5} parent=1 // pred_check_branch
      %20 = sbr.rel (0) target = $region17
    $region16: #{lenet_forward.5} parent=1 // pred_region
      _
    $region17: #{lenet_forward.5} parent=1 // pred_fallthru
      _
    // Predicated region
    $region18: #{lenet_forward.5} parent=1 // pred_check
      _
    $region19: #{lenet_forward.5} parent=1 // pred_check_branch
      %22 = sbr.rel (0) target = $region21
    $region20: #{lenet_forward.5} parent=1 // pred_region
      _
    $region21: #{lenet_forward.5} parent=1 // pred_fallthru
      _
    // Predicated region
    $region22: #{lenet_forward.5} parent=1 // pred_check
      _
    $region23: #{lenet_forward.5} parent=1 // pred_check_branch
      %24 = sbr.rel (0) target = $region25
    $region24: #{lenet_forward.5} parent=1 // pred_region
      _
    $region25: #{lenet_forward.5} parent=1 // pred_fallthru
      _
    // Predicated region
    $region26: #{lenet_forward.5} parent=1 // pred_check
      _
    $region27: #{lenet_forward.5} parent=1 // pred_check_branch
      %26 = sbr.rel (0) target = $region29
    $region28: #{lenet_forward.5} parent=1 // pred_region
      _
    $region29: #{lenet_forward.5} parent=1 // pred_fallthru
      _
    %v28 = vld [vmem:[%s0] sm:$0x3]
    %v29 = vld [vmem:[%s1] sm:$0xf]
    %v30 = vld [vmem:[%s1 + $0x4] sm:$0xf]
    %v31 = vld [vmem:[%s1 + $0x8] sm:$0xf]
    %v32 = vld [vmem:[%s1 + $0xc] sm:$0xf]
    %v33 = vld [vmem:[%s1 + $0x10] sm:$0xf]
    %v34 = vld [vmem:[%s1 + $0x14] sm:$0xf]
    %v35 = vld [vmem:[%s1 + $0x18] sm:$0xf]
    %v36 = vld [vmem:[%s1 + $0x1c] sm:$0xf]
    %v37 = vld [vmem:[%s1 + $0x20] sm:$0xf]
    %v38 = vld [vmem:[%s1 + $0x24] sm:$0xf]
    %v39 = vld [vmem:[%s1 + $0x28] sm:$0xf]
    %v40 = vld [vmem:[%s1 + $0x2c] sm:$0xf]
    %v41 = vld [vmem:[%s1 + $0x30] sm:$0xf]
    %v42 = vld [vmem:[%s1 + $0x34] sm:$0xf]
    %v43 = vld [vmem:[%s1 + $0x38] sm:$0xf]
    %v44 = vld [vmem:[%s1 + $0x3c] sm:$0xf]
    %v45 = vld [vmem:[%s1 + $0x40] sm:$0xf]
    %v46 = vld [vmem:[%s1 + $0x44] sm:$0xf]
    %v47 = vld [vmem:[%s1 + $0x48] sm:$0xf]
    %v48 = vld [vmem:[%s1 + $0x4c] sm:$0xf]
    %v49 = vld [vmem:[%s1 + $0x50] sm:$0xf]
    %v50 = vld [vmem:[%s1 + $0x54] sm:$0xf]
    %v51 = vld [vmem:[%s1 + $0x58] sm:$0xf]
    %v52 = vld [vmem:[%s1 + $0x5c] sm:$0xf]
    %v53 = vld [vmem:[%s1 + $0x60] sm:$0xf]
    %v54 = vld [vmem:[%s1 + $0x64] sm:$0xf]
    %v55 = vld [vmem:[%s1 + $0x68] sm:$0xf]
    %v56 = vld [vmem:[%s1 + $0x6c] sm:$0xf]
    %v57 = vld [vmem:[%s1 + $0x70] sm:$0xf]
    %v58 = vld [vmem:[%s1 + $0x74] sm:$0xf]
    %v59 = vld [vmem:[%s1 + $0x78] sm:$0xf]
    %v60 = vld [vmem:[%s1 + $0x7c] sm:$0xf]
    %v61 = vld [vmem:[%s2] sm:$0x1]
    %v63 = vlaneseq
    %v64 = vshrl.u32 %v63, 7
    %v65 = vsub.s32 0, %v64
    %v66 = vrot.slane %v61, %v65
    %v70 = vunpack.c.l.s4 1966171168
    %v71 = vunpack.c.0.s8 %v70
    %v72 = vlaneseq
    %v73 = vshrl.u32 %v72, 7
    %v74 = vsub.s32 %v71, %v73
    %v75 = vrot.slane %v28, %v74
    %v76 = vcombine.high %v75, %v75
    %v78 = vunpack.c.l.s4 1966171168
    %v79 = vunpack.c.0.s8 %v78
    %v80 = vlaneseq
    %v81 = vshrl.u32 %v80, 7
    %v82 = vsub.s32 %v79, %v81
    %v83 = vrot.slane %v75, %v82
    %v85 = vunpack.c.l.s4 1966171168
    %v86 = vunpack.c.0.s8 %v85
    %v87 = vlaneseq
    %v88 = vshrl.u32 %v87, 7
    %v89 = vsub.s32 %v86, %v88
    %v90 = vrot.slane %v76, %v89
    %v125 = vunpack.c.l.b16 %v29
    %v126 = vunpack.c.l.b16 %v30
    %v127 = vunpack.c.l.b16 %v31
    %v128 = vunpack.c.l.b16 %v32
    %v129 = vunpack.c.l.b16 %v33
    %v130 = vunpack.c.l.b16 %v34
    %v131 = vunpack.c.l.b16 %v35
    %v132 = vunpack.c.l.b16 %v36
    %v133 = vunpack.c.l.b16 %v37
    %v134 = vunpack.c.l.b16 %v38
    %v135 = vunpack.c.l.b16 %v39
    %v136 = vunpack.c.l.b16 %v40
    %v137 = vunpack.c.l.b16 %v41
    %v138 = vunpack.c.l.b16 %v42
    %v139 = vunpack.c.l.b16 %v43
    %v140 = vunpack.c.l.b16 %v44
    %v141 = vunpack.c.l.b16 %v45
    %v142 = vunpack.c.l.b16 %v46
    %v143 = vunpack.c.l.b16 %v47
    %v144 = vunpack.c.l.b16 %v48
    %v145 = vunpack.c.l.b16 %v49
    %v146 = vunpack.c.l.b16 %v50
    %v147 = vunpack.c.l.b16 %v51
    %v148 = vunpack.c.l.b16 %v52
    %v149 = vunpack.c.l.b16 %v53
    %v150 = vunpack.c.l.b16 %v54
    %v151 = vunpack.c.l.b16 %v55
    %v152 = vunpack.c.l.b16 %v56
    %v153 = vunpack.c.l.b16 %v57
    %v154 = vunpack.c.l.b16 %v58
    %v155 = vunpack.c.l.b16 %v59
    %v156 = vunpack.c.l.b16 %v60
    %v157 = vpack.c.b16 %v126, %v125
    %v158 = vpack.c.b16 %v128, %v127
    %v159 = vpack.c.b16 %v130, %v129
    %v160 = vpack.c.b16 %v132, %v131
    %v161 = vpack.c.b16 %v134, %v133
    %v162 = vpack.c.b16 %v136, %v135
    %v163 = vpack.c.b16 %v138, %v137
    %v164 = vpack.c.b16 %v140, %v139
    %v165 = vpack.c.b16 %v142, %v141
    %v166 = vpack.c.b16 %v144, %v143
    %v167 = vpack.c.b16 %v146, %v145
    %v168 = vpack.c.b16 %v148, %v147
    %v169 = vpack.c.b16 %v150, %v149
    %v170 = vpack.c.b16 %v152, %v151
    %v171 = vpack.c.b16 %v154, %v153
    %v172 = vpack.c.b16 %v156, %v155
    %189 = vmatprep.subr.bf16.mxu0 0
    %190 = vmatpush1.bf16.msra.mxu0 %v164
    %191 = vmatprep.subr.bf16.mxu0 0
    %192 = vmatpush1.bf16.msra.mxu0 %v163
    %193 = vmatprep.subr.bf16.mxu0 0
    %194 = vmatpush1.bf16.msra.mxu0 %v162
    %195 = vmatprep.subr.bf16.mxu0 0
    %196 = vmatpush1.bf16.msra.mxu0 %v161
    %197 = vmatprep.subr.bf16.mxu0 0
    %198 = vmatpush1.bf16.msra.mxu0 %v160
    %199 = vmatprep.subr.bf16.mxu0 0
    %200 = vmatpush1.bf16.msra.mxu0 %v159
    %201 = vmatprep.subr.bf16.mxu0 0
    %202 = vmatpush1.bf16.msra.mxu0 %v158
    %203 = vmatprep.subr.bf16.mxu0 0
    %204 = vmatpush1.bf16.msra.mxu0 %v157
    %205 = vmatprep.subr.bf16.mxu0 0
    %206 = vmatpush2.bf16.msra.mxu0 %v172
    %207 = vmatprep.subr.bf16.mxu0 0
    %208 = vmatpush2.bf16.msra.mxu0 %v171
    %209 = vmatprep.subr.bf16.mxu0 0
    %210 = vmatpush2.bf16.msra.mxu0 %v170
    %211 = vmatprep.subr.bf16.mxu0 0
    %212 = vmatpush2.bf16.msra.mxu0 %v169
    %213 = vmatprep.subr.bf16.mxu0 0
    %214 = vmatpush2.bf16.msra.mxu0 %v168
    %215 = vmatprep.subr.bf16.mxu0 0
    %216 = vmatpush2.bf16.msra.mxu0 %v167
    %217 = vmatprep.subr.bf16.mxu0 0
    %218 = vmatpush2.bf16.msra.mxu0 %v166
    %219 = vmatprep.subr.bf16.mxu0 0
    %220 = vmatpush2.bf16.msra.mxu0 %v165
    %221 = vmatprep.mubr.bf16.mxu0 %v90
    %222 = vmatmul.mubr.bf16.gmra.mxu0 %v83
    %v223 = vpop.f32.mrf.mxu0
    %v224 = vadd.f32 %v66, %v223
    %v225 = vpop.f32.mrf.mxu0
    %v226 = vpop.f32.mrf.mxu0
    %v227 = vpop.f32.mrf.mxu0
    %228 = vdwg.mxu0
    %v229 = vmax.f32 %v224, 0.0
    %v230 = vpack.c.bf16 %v229, %v229
    %v231 = vld [vmem:[%s3] sm:$0xf]
    %v232 = vld [vmem:[%s3 + $0x4] sm:$0xf]
    %v233 = vld [vmem:[%s3 + $0x8] sm:$0xf]
    %v234 = vld [vmem:[%s3 + $0xc] sm:$0xf]
    %v235 = vld [vmem:[%s3 + $0x10] sm:$0xf]
    %v236 = vld [vmem:[%s3 + $0x14] sm:$0xf]
    %v237 = vld [vmem:[%s3 + $0x18] sm:$0xf]
    %v238 = vld [vmem:[%s3 + $0x1c] sm:$0xf]
    %v239 = vld [vmem:[%s3 + $0x20] sm:$0xf]
    %v240 = vld [vmem:[%s3 + $0x24] sm:$0xf]
    %v241 = vld [vmem:[%s3 + $0x28] sm:$0xf]
    %v242 = vld [vmem:[%s3 + $0x2c] sm:$0xf]
    %v243 = vld [vmem:[%s3 + $0x30] sm:$0xf]
    %v244 = vld [vmem:[%s3 + $0x34] sm:$0xf]
    %v245 = vld [vmem:[%s3 + $0x38] sm:$0xf]
    %v246 = vld [vmem:[%s3 + $0x3c] sm:$0xf]
    %v247 = vld [vmem:[%s4] sm:$0x1]
    %v249 = vlaneseq
    %v250 = vshrl.u32 %v249, 7
    %v251 = vsub.s32 0, %v250
    %v252 = vrot.slane %v247, %v251
    %v270 = vunpack.c.l.b16 %v231
    %v271 = vunpack.c.l.b16 %v232
    %v272 = vunpack.c.l.b16 %v233
    %v273 = vunpack.c.l.b16 %v234
    %v274 = vunpack.c.l.b16 %v235
    %v275 = vunpack.c.l.b16 %v236
    %v276 = vunpack.c.l.b16 %v237
    %v277 = vunpack.c.l.b16 %v238
    %v278 = vunpack.c.l.b16 %v239
    %v279 = vunpack.c.l.b16 %v240
    %v280 = vunpack.c.l.b16 %v241
    %v281 = vunpack.c.l.b16 %v242
    %v282 = vunpack.c.l.b16 %v243
    %v283 = vunpack.c.l.b16 %v244
    %v284 = vunpack.c.l.b16 %v245
    %v285 = vunpack.c.l.b16 %v246
    %v286 = vpack.c.b16 %v271, %v270
    %v287 = vpack.c.b16 %v273, %v272
    %v288 = vpack.c.b16 %v275, %v274
    %v289 = vpack.c.b16 %v277, %v276
    %v290 = vpack.c.b16 %v279, %v278
    %v291 = vpack.c.b16 %v281, %v280
    %v292 = vpack.c.b16 %v283, %v282
    %v293 = vpack.c.b16 %v285, %v284
    %302 = vmatprep.subr.bf16.mxu0 0
    %303 = vmatpush1.bf16.msra.mxu0 %v293
    %304 = vmatprep.subr.bf16.mxu0 0
    %305 = vmatpush1.bf16.msra.mxu0 %v292
    %306 = vmatprep.subr.bf16.mxu0 0
    %307 = vmatpush1.bf16.msra.mxu0 %v291
    %308 = vmatprep.subr.bf16.mxu0 0
    %309 = vmatpush1.bf16.msra.mxu0 %v290
    %310 = vmatprep.subr.bf16.mxu0 0
    %311 = vmatpush1.bf16.msra.mxu0 %v289
    %312 = vmatprep.subr.bf16.mxu0 0
    %313 = vmatpush1.bf16.msra.mxu0 %v288
    %314 = vmatprep.subr.bf16.mxu0 0
    %315 = vmatpush1.bf16.msra.mxu0 %v287
    %316 = vmatprep.subr.bf16.mxu0 0
    %317 = vmatpush1.bf16.msra.mxu0 %v286
    %318 = vmatprep.subr.bf16.mxu0 0
    %319 = vmatpush2.bf16.msra.mxu0 0
    %320 = vmatprep.subr.bf16.mxu0 0
    %321 = vmatpush2.bf16.msra.mxu0 0
    %322 = vmatprep.subr.bf16.mxu0 0
    %323 = vmatpush2.bf16.msra.mxu0 0
    %324 = vmatprep.subr.bf16.mxu0 0
    %325 = vmatpush2.bf16.msra.mxu0 0
    %326 = vmatprep.subr.bf16.mxu0 0
    %327 = vmatpush2.bf16.msra.mxu0 0
    %328 = vmatprep.subr.bf16.mxu0 0
    %329 = vmatpush2.bf16.msra.mxu0 0
    %330 = vmatprep.subr.bf16.mxu0 0
    %331 = vmatpush2.bf16.msra.mxu0 0
    %332 = vmatprep.subr.bf16.mxu0 0
    %333 = vmatpush2.bf16.msra.mxu0 0
    %334 = vmatprep.mubr.bf16.mxu0 0
    %335 = vmatmul.mubr.bf16.gmra.mxu0 %v230
    %v336 = vpop.f32.mrf.mxu0
    %v337 = vadd.f32 %v252, %v336
    %v338 = vpop.f32.mrf.mxu0
    %v339 = vpop.f32.mrf.mxu0
    %v340 = vpop.f32.mrf.mxu0
    %341 = vdwg.mxu0
    %v342 = vmax.f32 %v337, 0.0
    %v343 = vpack.c.bf16 %v342, %v342
    %v344 = vld [vmem:[%s5] sm:$0xf]
    %v345 = vld [vmem:[%s5 + $0x4] sm:$0xf]
    %v346 = vld [vmem:[%s5 + $0x8] sm:$0xf]
    %v347 = vld [vmem:[%s5 + $0xc] sm:$0xf]
    %v348 = vld [vmem:[%s5 + $0x10] sm:$0xf]
    %v349 = vld [vmem:[%s5 + $0x14] sm:$0xf]
    %v350 = vld [vmem:[%s5 + $0x18] sm:$0xf]
    %v351 = vld [vmem:[%s5 + $0x1c] sm:$0xf]
    %v352 = vld [vmem:[%s5 + $0x20] sm:$0xf]
    %v353 = vld [vmem:[%s5 + $0x24] sm:$0xf]
    %v354 = vld [vmem:[%s5 + $0x28] sm:$0xf]
    %v355 = vld [vmem:[%s5 + $0x2c] sm:$0xf]
    %v356 = vld [vmem:[%s5 + $0x30] sm:$0xf]
    %v357 = vld [vmem:[%s5 + $0x34] sm:$0xf]
    %v358 = vld [vmem:[%s5 + $0x38] sm:$0xf]
    %v359 = vld [vmem:[%s5 + $0x3c] sm:$0xf]
    %v360 = vld [vmem:[%s6] sm:$0x1]
    %v362 = vlaneseq
    %v363 = vshrl.u32 %v362, 7
    %v364 = vsub.s32 0, %v363
    %v365 = vrot.slane %v360, %v364
    %v383 = vunpack.c.l.b16 %v344
    %v384 = vunpack.c.l.b16 %v345
    %v385 = vunpack.c.l.b16 %v346
    %v386 = vunpack.c.l.b16 %v347
    %v387 = vunpack.c.l.b16 %v348
    %v388 = vunpack.c.l.b16 %v349
    %v389 = vunpack.c.l.b16 %v350
    %v390 = vunpack.c.l.b16 %v351
    %v391 = vunpack.c.l.b16 %v352
    %v392 = vunpack.c.l.b16 %v353
    %v393 = vunpack.c.l.b16 %v354
    %v394 = vunpack.c.l.b16 %v355
    %v395 = vunpack.c.l.b16 %v356
    %v396 = vunpack.c.l.b16 %v357
    %v397 = vunpack.c.l.b16 %v358
    %v398 = vunpack.c.l.b16 %v359
    %v399 = vpack.c.b16 %v384, %v383
    %v400 = vpack.c.b16 %v386, %v385
    %v401 = vpack.c.b16 %v388, %v387
    %v402 = vpack.c.b16 %v390, %v389
    %v403 = vpack.c.b16 %v392, %v391
    %v404 = vpack.c.b16 %v394, %v393
    %v405 = vpack.c.b16 %v396, %v395
    %v406 = vpack.c.b16 %v398, %v397
    %415 = vmatprep.subr.bf16.mxu0 0
    %416 = vmatpush1.bf16.msra.mxu0 %v406
    %417 = vmatprep.subr.bf16.mxu0 0
    %418 = vmatpush1.bf16.msra.mxu0 %v405
    %419 = vmatprep.subr.bf16.mxu0 0
    %420 = vmatpush1.bf16.msra.mxu0 %v404
    %421 = vmatprep.subr.bf16.mxu0 0
    %422 = vmatpush1.bf16.msra.mxu0 %v403
    %423 = vmatprep.subr.bf16.mxu0 0
    %424 = vmatpush1.bf16.msra.mxu0 %v402
    %425 = vmatprep.subr.bf16.mxu0 0
    %426 = vmatpush1.bf16.msra.mxu0 %v401
    %427 = vmatprep.subr.bf16.mxu0 0
    %428 = vmatpush1.bf16.msra.mxu0 %v400
    %429 = vmatprep.subr.bf16.mxu0 0
    %430 = vmatpush1.bf16.msra.mxu0 %v399
    %431 = vmatprep.subr.bf16.mxu0 0
    %432 = vmatpush2.bf16.msra.mxu0 0
    %433 = vmatprep.subr.bf16.mxu0 0
    %434 = vmatpush2.bf16.msra.mxu0 0
    %435 = vmatprep.subr.bf16.mxu0 0
    %436 = vmatpush2.bf16.msra.mxu0 0
    %437 = vmatprep.subr.bf16.mxu0 0
    %438 = vmatpush2.bf16.msra.mxu0 0
    %439 = vmatprep.subr.bf16.mxu0 0
    %440 = vmatpush2.bf16.msra.mxu0 0
    %441 = vmatprep.subr.bf16.mxu0 0
    %442 = vmatpush2.bf16.msra.mxu0 0
    %443 = vmatprep.subr.bf16.mxu0 0
    %444 = vmatpush2.bf16.msra.mxu0 0
    %445 = vmatprep.subr.bf16.mxu0 0
    %446 = vmatpush2.bf16.msra.mxu0 0
    %447 = vmatprep.mubr.bf16.mxu0 0
    %448 = vmatmul.mubr.bf16.gmra.mxu0 %v343
    %v449 = vpop.f32.mrf.mxu0
    %v450 = vadd.f32 %v365, %v449
    %v451 = vpop.f32.mrf.mxu0
    %v452 = vpop.f32.mrf.mxu0
    %v453 = vpop.f32.mrf.mxu0
    %454 = vdwg.mxu0
    %v455 = vmax.f32 %v450, 0.0
    %vm456 = vcmask 74752
    %457 = vst.msk [vmem:[#allocation2] sm:$0x3] %vm456, %v455
    // Predicated region
    $region30: #{lenet_forward.5} parent=1 // pred_check
      _
    $region31: #{lenet_forward.5} parent=1 // pred_check_branch
      %459 = sbr.rel (0) target = $region33
    $region32: #{lenet_forward.5} parent=1 // pred_region
      %s461 = ssub.s32 32, 32
      %462 = vsyncadd [#allocation3], %s461
      %s464 = sshll.u32 [#allocation2], 4
      %s465 = int_to_ptr.vmem [resolvable:$true] %s464
      %467 = dma.vmem_to_hbm [thread:$0]  %s465, 32, %s7, [#allocation3]
    $region33: #{lenet_forward.5} parent=1 // pred_fallthru
      _
    // Predicated region
    $region34: #{lenet_forward.5} parent=1 // pred_check
      _
    $region35: #{lenet_forward.5} parent=1 // pred_check_branch
      %469 = sbr.rel (0) target = $region37
    $region36: #{lenet_forward.5} parent=1 // pred_region
      %470 = dma.done [#allocation3], 32
    $region37: #{lenet_forward.5} parent=1 // pred_fallthru
      _
    %471 = vsyncpa [#allocation3], 1

</llo_original>
